<compile_context>
chip_gen: v7x
topology: tpu7x:2x2x1
jax: 0.10.0
libtpu: 0.0.40
codegen_flags: <defaults>
</compile_context>

<pallas_src>
import functools

import jax
import jax.numpy as jnp
from jax.experimental import pallas as pl
from jax.experimental.pallas import tpu as pltpu

# ---- module hyperparameters (hard-coded inside the PyTorch module) ----
K = 7
STRIDE = 3
PADDING = 1
LN_EPS = 1e-5


def _dilation_unit_kernel(x_ref, w_ref, p_ref, q_ref, g_ref, bt_ref, o_ref):
    # x_ref : (1, B_TILE, C_in*L_in)      bf16  raw input rows (one per batch elem)
    # w_ref : (C_in*L_in, C_out*L_out)    bf16  folded zero-insert + im2col + weight
    # p_ref : (C_out*L_out, C_out)        f32   segment-mean pooling matrix (1/L_out)
    # q_ref : (C_out, C_out*L_out)        f32   0/1 broadcast-back matrix
    # g_ref : (1, C_out*L_out)            f32   LayerNorm gamma, tiled per channel
    # bt_ref: (1, C_out*L_out)            f32   LayerNorm beta, tiled per channel
    # o_ref : (1, B_TILE, C_out*L_out)    f32   lane-dense output block
    x = x_ref[0]                                                 # (B, Cin*Lin) bf16

    # (1) ConvTranspose1d as ONE matmul (all rearrangement pre-folded into Wbig).
    y = jnp.dot(x, w_ref[...], preferred_element_type=jnp.float32)   # (B, Cout*Lout) f32

    # (2) LayerNorm over each L_out group. Stats via pooling matmuls on the
    #     (otherwise idle) MXU; two-pass form for numerical robustness.
    mean = jnp.dot(jnp.dot(y, p_ref[...], preferred_element_type=jnp.float32),
                   q_ref[...], preferred_element_type=jnp.float32)   # (B, Cout*Lout)
    yc = y - mean
    var = jnp.dot(jnp.dot(yc * yc, p_ref[...], preferred_element_type=jnp.float32),
                  q_ref[...], preferred_element_type=jnp.float32)
    z = yc * jax.lax.rsqrt(var + LN_EPS) * g_ref[...] + bt_ref[...]

    # (3) SiLU (sigmoid rides the EUP slot).
    o_ref[0] = (z * jax.nn.sigmoid(z)).astype(o_ref.dtype)


@functools.partial(jax.jit, static_argnames=("b_tile",))
def dilation_convolution_1d_unit(x, weight, bias, gamma, beta, *, b_tile=None):
    """x: (N, C_in, L_in) f32. weight: (C_in, C_out, K) (PyTorch ConvTranspose1d layout)."""
    n, c_in, l_in = x.shape
    c_out = weight.shape[1]
    l_out = (l_in - 1) * STRIDE - 2 * PADDING + K
    assert gamma.shape == (l_out,), "LayerNorm(out_channels) requires L_out == out_channels"

    if b_tile is None:
        # grid=2 by default so both v7x TensorCores get a step; on single-TC
        # v5e/v6e passing b_tile=n (grid=1) saves one ~0.35us step.
        b_tile = n // 2 if (n >= 2 and n % 2 == 0) else n
    assert n % b_tile == 0, "batch must be divisible by b_tile (pad the batch if needed)"

    # The ConvTranspose1d bias is constant along the normalized (length) axis,
    # so the LayerNorm cancels it exactly -> dead work, dropped from the kernel.
    del bias

    # ---- trace-time glue: fold conv into one matrix + tiny pooling matrices ----
    # Wbig[ci*L_in + i, co*L_out + l] = weight[ci, co, l - i*STRIDE + PADDING] (if valid)
    i_idx = jnp.arange(l_in)
    l_idx = jnp.arange(l_out)
    k_pos = l_idx[None, :] - STRIDE * i_idx[:, None] + PADDING          # (L_in, L_out)
    valid = (k_pos >= 0) & (k_pos < K)
    k_safe = jnp.clip(k_pos, 0, K - 1)
    wg = jnp.where(valid[None, None, :, :], weight[:, :, k_safe], 0.0)  # (Cin, Cout, Lin, Lout)
    wbig = jnp.transpose(wg, (0, 2, 1, 3)).reshape(c_in * l_in, c_out * l_out)
    wbig = wbig.astype(jnp.bfloat16)

    # Pooling matrices for LayerNorm statistics on the MXU.
    ch_of_col = jnp.repeat(jnp.arange(c_out), l_out)                    # (Cout*Lout,)
    pmat = (ch_of_col[:, None] == jnp.arange(c_out)[None, :]).astype(jnp.float32) / l_out
    qmat = (jnp.arange(c_out)[:, None] == ch_of_col[None, :]).astype(jnp.float32)

    g_t = jnp.tile(gamma.astype(jnp.float32), c_out).reshape(1, c_out * l_out)
    bt_t = jnp.tile(beta.astype(jnp.float32), c_out).reshape(1, c_out * l_out)

    # Lane-dense input rows: (grid, B_TILE, C_in*L_in) -- a free reshape.
    x_r = x.astype(jnp.bfloat16).reshape(n // b_tile, b_tile, c_in * l_in)

    out3 = pl.pallas_call(
        _dilation_unit_kernel,
        out_shape=jax.ShapeDtypeStruct((n // b_tile, b_tile, c_out * l_out), jnp.float32),
        grid_spec=pltpu.PrefetchScalarGridSpec(
            num_scalar_prefetch=0,
            grid=(n // b_tile,),
            in_specs=[
                pl.BlockSpec((1, b_tile, c_in * l_in), lambda i: (i, 0, 0)),
                pl.BlockSpec((c_in * l_in, c_out * l_out), lambda i: (0, 0)),
                pl.BlockSpec((c_out * l_out, c_out), lambda i: (0, 0)),
                pl.BlockSpec((c_out, c_out * l_out), lambda i: (0, 0)),
                pl.BlockSpec((1, c_out * l_out), lambda i: (0, 0)),
                pl.BlockSpec((1, c_out * l_out), lambda i: (0, 0)),
            ],
            out_specs=pl.BlockSpec((1, b_tile, c_out * l_out), lambda i: (i, 0, 0)),
        ),
        compiler_params=pltpu.CompilerParams(
            dimension_semantics=("parallel",)),
    )(x_r, wbig, pmat, qmat, g_t, bt_t)

    # (grid, B_TILE, C_out*L_out) is already (N, C_out, L_out) row-major: free reshape.
    return out3.reshape(n, c_out, l_out)


@jax.jit
def _reference(x, weight, bias, gamma, beta):
    """Direct (scatter-form) ConvTranspose1d + LayerNorm(last axis) + SiLU reference."""
    n, c_in, l_in = x.shape
    c_out = weight.shape[1]
    l_out = (l_in - 1) * STRIDE - 2 * PADDING + K
    y = jnp.zeros((n, c_out, l_out), dtype=jnp.float32)
    for i in range(l_in):
        for k in range(K):
            l = i * STRIDE - PADDING + k
            if 0 <= l < l_out:
                y = y.at[:, :, l].add(jnp.einsum('nc,cd->nd', x[:, :, i], weight[:, :, k]))
    y = y + bias[None, :, None]
    mean = jnp.mean(y, axis=-1, keepdims=True)
    var = jnp.mean((y - mean) ** 2, axis=-1, keepdims=True)
    y = (y - mean) * jax.lax.rsqrt(var + LN_EPS)
    y = y * gamma[None, None, :] + beta[None, None, :]
    return y * jax.nn.sigmoid(y)


if __name__ == "__main__":
    # LayerNorm(out_channels) on a (N, C_out, L_out) tensor requires
    # L_out == out_channels; L_out = 3*L_in + 2, so L_in=10 -> out_channels=32.
    N, C_IN, L_IN = 8, 4, 10
    C_OUT = 3 * L_IN + 2  # 32

    key = jax.random.PRNGKey(0)
    kx, kw, kb, kg, kbe = jax.random.split(key, 5)
    x = jax.random.normal(kx, (N, C_IN, L_IN), dtype=jnp.float32)
    weight = 0.1 * jax.random.normal(kw, (C_IN, C_OUT, K), dtype=jnp.float32)
    bias = 0.1 * jax.random.normal(kb, (C_OUT,), dtype=jnp.float32)
    gamma = 1.0 + 0.1 * jax.random.normal(kg, (C_OUT,), dtype=jnp.float32)
    beta = 0.1 * jax.random.normal(kbe, (C_OUT,), dtype=jnp.float32)

    out = dilation_convolution_1d_unit(x, weight, bias, gamma, beta, b_tile=4)  # grid=2
    out = jax.block_until_ready(out)
    assert out.shape == (N, C_OUT, 3 * L_IN + 2)

    # Check vs the reference fed the same bf16-rounded x/weight the MXU conv
    # path sees. Tolerance also covers any reduced-precision MXU passes in the
    # f32 LayerNorm-stat pooling matmuls.
    x_bf = x.astype(jnp.bfloat16).astype(jnp.float32)
    w_bf = weight.astype(jnp.bfloat16).astype(jnp.float32)
    ref = _reference(x_bf, w_bf, bias, gamma, beta)
    assert jnp.allclose(out, ref, atol=2e-3, rtol=2e-3), "mismatch vs bf16-rounded reference"

    # Coarse check vs the full-f32 reference (bounds the bf16 rounding error).
    ref32 = _reference(x, weight, bias, gamma, beta)
    assert jnp.allclose(out, ref32, atol=5e-2, rtol=5e-2), "mismatch vs f32 reference"

    print("KERNEL_OK")
</pallas_src>

<mosaic_0001>
module attributes {stable_mosaic.version = 11 : i64} {
  func.func @_dilation_unit_kernel(%arg0: i32, %arg1: memref<1x4x40xbf16, #tpu.memory_space<vmem>>, %arg2: memref<40x1024xbf16, #tpu.memory_space<vmem>>, %arg3: memref<1024x32xf32, #tpu.memory_space<vmem>>, %arg4: memref<32x1024xf32, #tpu.memory_space<vmem>>, %arg5: memref<1x1024xf32, #tpu.memory_space<vmem>>, %arg6: memref<1x1024xf32, #tpu.memory_space<vmem>>, %arg7: memref<1x4x1024xf32, #tpu.memory_space<vmem>>) attributes {dimension_semantics = [#tpu.dimension_semantics<parallel>], iteration_bounds = array<i64: 2>, scalar_prefetch = 0 : i64, scratch_operands = 0 : i64, tpu.core_type = #tpu.core_type<tc>, window_params = [{transform_indices = @transform_0, window_bounds = array<i64: 1, 4, 40>}, {pipeline_mode = #tpu.pipeline_mode<synchronous>, transform_indices = @transform_1, window_bounds = array<i64: 40, 1024>}, {pipeline_mode = #tpu.pipeline_mode<synchronous>, transform_indices = @transform_2, window_bounds = array<i64: 1024, 32>}, {pipeline_mode = #tpu.pipeline_mode<synchronous>, transform_indices = @transform_3, window_bounds = array<i64: 32, 1024>}, {pipeline_mode = #tpu.pipeline_mode<synchronous>, transform_indices = @transform_4, window_bounds = array<i64: 1, 1024>}, {pipeline_mode = #tpu.pipeline_mode<synchronous>, transform_indices = @transform_5, window_bounds = array<i64: 1, 1024>}, {transform_indices = @transform_6, window_bounds = array<i64: 1, 4, 1024>}]} {
    %c0 = arith.constant 0 : index
    %c0_0 = arith.constant 0 : index
    %c0_1 = arith.constant 0 : index
    %0 = vector.load %arg1[%c0, %c0_0, %c0_1] : memref<1x4x40xbf16, #tpu.memory_space<vmem>>, vector<1x4x40xbf16>
    %1 = vector.shape_cast %0 : vector<1x4x40xbf16> to vector<4x40xbf16>
    %c0_2 = arith.constant 0 : index
    %c0_3 = arith.constant 0 : index
    %2 = vector.load %arg2[%c0_2, %c0_3] : memref<40x1024xbf16, #tpu.memory_space<vmem>>, vector<40x1024xbf16>
    %cst = arith.constant dense<0.000000e+00> : vector<4x1024xf32>
    %3 = tpu.matmul %1, %2, %cst {dimension_numbers = #tpu.dot_dimension_numbers<[1], [0], [0], [1], [0, 0, 1, 1], [], []>} : vector<4x40xbf16>, vector<40x1024xbf16>, vector<4x1024xf32> -> vector<4x1024xf32>
    %c0_4 = arith.constant 0 : index
    %c0_5 = arith.constant 0 : index
    %4 = vector.load %arg3[%c0_4, %c0_5] : memref<1024x32xf32, #tpu.memory_space<vmem>>, vector<1024x32xf32>
    %cst_6 = arith.constant dense<0.000000e+00> : vector<4x32xf32>
    %5 = tpu.matmul %3, %4, %cst_6 {dimension_numbers = #tpu.dot_dimension_numbers<[1], [0], [0], [1], [0, 0, 1, 1], [], []>} : vector<4x1024xf32>, vector<1024x32xf32>, vector<4x32xf32> -> vector<4x32xf32>
    %c0_7 = arith.constant 0 : index
    %c0_8 = arith.constant 0 : index
    %6 = vector.load %arg4[%c0_7, %c0_8] : memref<32x1024xf32, #tpu.memory_space<vmem>>, vector<32x1024xf32>
    %cst_9 = arith.constant dense<0.000000e+00> : vector<4x1024xf32>
    %7 = tpu.matmul %5, %6, %cst_9 {dimension_numbers = #tpu.dot_dimension_numbers<[1], [0], [0], [1], [0, 0, 1, 1], [], []>} : vector<4x32xf32>, vector<32x1024xf32>, vector<4x1024xf32> -> vector<4x1024xf32>
    %8 = arith.subf %3, %7 : vector<4x1024xf32>
    %9 = arith.mulf %8, %8 : vector<4x1024xf32>
    %c0_10 = arith.constant 0 : index
    %c0_11 = arith.constant 0 : index
    %10 = vector.load %arg3[%c0_10, %c0_11] : memref<1024x32xf32, #tpu.memory_space<vmem>>, vector<1024x32xf32>
    %cst_12 = arith.constant dense<0.000000e+00> : vector<4x32xf32>
    %11 = tpu.matmul %9, %10, %cst_12 {dimension_numbers = #tpu.dot_dimension_numbers<[1], [0], [0], [1], [0, 0, 1, 1], [], []>} : vector<4x1024xf32>, vector<1024x32xf32>, vector<4x32xf32> -> vector<4x32xf32>
    %c0_13 = arith.constant 0 : index
    %c0_14 = arith.constant 0 : index
    %12 = vector.load %arg4[%c0_13, %c0_14] : memref<32x1024xf32, #tpu.memory_space<vmem>>, vector<32x1024xf32>
    %cst_15 = arith.constant dense<0.000000e+00> : vector<4x1024xf32>
    %13 = tpu.matmul %11, %12, %cst_15 {dimension_numbers = #tpu.dot_dimension_numbers<[1], [0], [0], [1], [0, 0, 1, 1], [], []>} : vector<4x32xf32>, vector<32x1024xf32>, vector<4x1024xf32> -> vector<4x1024xf32>
    %cst_16 = arith.constant 9.99999974E-6 : f32
    %14 = vector.broadcast %cst_16 : f32 to vector<4x1024xf32>
    %15 = arith.addf %13, %14 : vector<4x1024xf32>
    %16 = math.rsqrt %15 : vector<4x1024xf32>
    %17 = arith.mulf %8, %16 : vector<4x1024xf32>
    %c0_17 = arith.constant 0 : index
    %c0_18 = arith.constant 0 : index
    %18 = vector.load %arg5[%c0_17, %c0_18] : memref<1x1024xf32, #tpu.memory_space<vmem>>, vector<1x1024xf32>
    %19 = vector.broadcast %18 : vector<1x1024xf32> to vector<4x1024xf32>
    %20 = arith.mulf %17, %19 : vector<4x1024xf32>
    %c0_19 = arith.constant 0 : index
    %c0_20 = arith.constant 0 : index
    %21 = vector.load %arg6[%c0_19, %c0_20] : memref<1x1024xf32, #tpu.memory_space<vmem>>, vector<1x1024xf32>
    %22 = vector.broadcast %21 : vector<1x1024xf32> to vector<4x1024xf32>
    %23 = arith.addf %20, %22 : vector<4x1024xf32>
    %24 = arith.negf %23 : vector<4x1024xf32>
    %25 = math.exp %24 : vector<4x1024xf32>
    %cst_21 = arith.constant 1.000000e+00 : f32
    %26 = vector.broadcast %cst_21 : f32 to vector<4x1024xf32>
    %27 = arith.addf %26, %25 : vector<4x1024xf32>
    %28 = arith.divf %26, %27 : vector<4x1024xf32>
    %29 = arith.mulf %23, %28 : vector<4x1024xf32>
    %c0_22 = arith.constant 0 : index
    %c0_23 = arith.constant 0 : index
    %c0_24 = arith.constant 0 : index
    %30 = vector.load %arg7[%c0_22, %c0_23, %c0_24] : memref<1x4x1024xf32, #tpu.memory_space<vmem>>, vector<1x4x1024xf32>
    %31 = vector.shape_cast %30 : vector<1x4x1024xf32> to vector<4x1024xf32>
    %32 = vector.shape_cast %29 : vector<4x1024xf32> to vector<1x4x1024xf32>
    tpu.vector_store %arg7[%c0_22, %c0_23, %c0_24], %32 {strides = array<i32>} : memref<1x4x1024xf32, #tpu.memory_space<vmem>>, vector<1x4x1024xf32>,
    return
  }
  func.func @transform_0(%arg0: i32) -> (i32, i32, i32) {
    %c0_i32 = arith.constant 0 : i32
    %c0_i32_0 = arith.constant 0 : i32
    %c0_i32_1 = arith.constant 0 : i32
    return %arg0, %c0_i32, %c0_i32_0 : i32, i32, i32
  }
  func.func @transform_1(%arg0: i32) -> (i32, i32) {
    %c0_i32 = arith.constant 0 : i32
    %c0_i32_0 = arith.constant 0 : i32
    %c0_i32_1 = arith.constant 0 : i32
    return %c0_i32, %c0_i32_0 : i32, i32
  }
  func.func @transform_2(%arg0: i32) -> (i32, i32) {
    %c0_i32 = arith.constant 0 : i32
    %c0_i32_0 = arith.constant 0 : i32
    %c0_i32_1 = arith.constant 0 : i32
    return %c0_i32, %c0_i32_0 : i32, i32
  }
  func.func @transform_3(%arg0: i32) -> (i32, i32) {
    %c0_i32 = arith.constant 0 : i32
    %c0_i32_0 = arith.constant 0 : i32
    %c0_i32_1 = arith.constant 0 : i32
    return %c0_i32, %c0_i32_0 : i32, i32
  }
  func.func @transform_4(%arg0: i32) -> (i32, i32) {
    %c0_i32 = arith.constant 0 : i32
    %c0_i32_0 = arith.constant 0 : i32
    %c0_i32_1 = arith.constant 0 : i32
    return %c0_i32, %c0_i32_0 : i32, i32
  }
  func.func @transform_5(%arg0: i32) -> (i32, i32) {
    %c0_i32 = arith.constant 0 : i32
    %c0_i32_0 = arith.constant 0 : i32
    %c0_i32_1 = arith.constant 0 : i32
    return %c0_i32, %c0_i32_0 : i32, i32
  }
  func.func @transform_6(%arg0: i32) -> (i32, i32, i32) {
    %c0_i32 = arith.constant 0 : i32
    %c0_i32_0 = arith.constant 0 : i32
    %c0_i32_1 = arith.constant 0 : i32
    return %arg0, %c0_i32, %c0_i32_0 : i32, i32, i32
  }
}

</mosaic_0001>

<llo_original>
// kernel: eq.15
$region0: #{eq.15}
  %s0 = inlined_call_operand.vmem [shape: s32[32,32], index: 0, kind: input, shape index: {}]
  %s1 = inlined_call_operand.vmem [shape: s32[1024], index: 1, kind: output, shape index: {}]
  %v2 = vld [vmem:[%s0] ss:$4 sm:$0xff]
  %vm3 = vcmask 261120
  %4 = vst.msk [vmem:[%s1] sm:$0xff] %vm3, %v2
  %s5 = scalar_lea.vmem %s0, 3
  %v6 = vld [vmem:[%s5] ss:$4 sm:$0xff]
  %7 = vrot.lane.b32.xlu0 %v6, 96
  %v8 = vpop.permute.xlu0 %7
  %vm9 = vcmask 1048320
  %10 = vst.msk [vmem:[%s1] sm:$0xff] %vm9, %v8
  %s11 = scalar_lea.vmem %s0, 2
  %v12 = vld [vmem:[%s11] ss:$4 sm:$0xff]
  %13 = vrot.lane.b32.xlu0 %v12, 64
  %v14 = vpop.permute.xlu0 %13
  %vm15 = vcmask 785920
  %16 = vst.msk [vmem:[%s1] sm:$0xff] %vm15, %v14
  %s17 = scalar_lea.vmem %s0, 1
  %v18 = vld [vmem:[%s17] ss:$4 sm:$0xff]
  %19 = vrot.lane.b32.xlu0 %v18, 32
  %v20 = vpop.permute.xlu0 %19
  %vm21 = vcmask 523520
  %22 = vst.msk [vmem:[%s1] sm:$0xff] %vm21, %v20

// kernel: tile.13
$region0: #{tile.13}
  #allocation0 [shape = 's32[1]{0}', space=sflag, size = 0x4, scoped, tag = 'scoped memory for tile.13']
  %s0 = inlined_call_operand.vmem [shape: f32[32], index: 0, kind: input, shape index: {}]
  %s1 = inlined_call_operand.vmem [shape: f32[32,32], index: 1, kind: output, shape index: {}]
  // Predicated region
  $region2: #{tile.13} parent=0 // pred_check
    _
  $region3: #{tile.13} parent=0 // pred_check_branch
    %3 = sbr.rel (0) target = $region5
  $region4: #{tile.13} parent=0 // pred_region
    _
  $region5: #{tile.13} parent=0 // pred_fallthru
    _
  %v4 = vld [vmem:[%s0] ss:$0 sm:$0xff]
  %5 = vst [vmem:[%s1] sm:$0xff] %v4
  %s6 = scalar_lea.vmem %s1, 8
  %7 = vst [vmem:[%s6] sm:$0xff] %v4
  %s8 = scalar_lea.vmem %s1, 16
  %9 = vst [vmem:[%s8] sm:$0xff] %v4
  %s10 = scalar_lea.vmem %s1, 24
  %11 = vst [vmem:[%s10] sm:$0xff] %v4

// kernel: tile.14
$region0: #{tile.14}
  %s0 = inlined_call_operand.vmem [shape: f32[32,32], index: 0, kind: input, shape index: {}]
  %s1 = inlined_call_operand.vmem [shape: f32[1,1024], index: 1, kind: output, shape index: {}]
  $region1: #{tile.14} parent=0
    #allocation0 [shape = 'u8[32768]{0}', space=vmem, size = 0x8000, scoped, tag = 'scoped mem for output reshape']
    %v2 = vld [vmem:[%s0] ss:$4 sm:$0xff]
    %vm3 = vcmask 261120
    %4 = vst.msk [vmem:[#allocation0] ss:$8 sm:$0xf] %vm3, %v2
    %5 = vst.msk [vmem:[#allocation0] ss:$8 sm:$0xf0] %vm3, %v2
    %s6 = scalar_lea.vmem %s0, 3
    %v7 = vld [vmem:[%s6] ss:$4 sm:$0xff]
    %8 = vrot.lane.b32.xlu0 %v7, 96
    %v9 = vpop.permute.xlu0 %8
    %vm10 = vcmask 1048320
    %11 = vst.msk [vmem:[#allocation0] ss:$8 sm:$0xf] %vm10, %v9
    %12 = vst.msk [vmem:[#allocation0] ss:$8 sm:$0xf0] %vm10, %v9
    %s13 = scalar_lea.vmem %s0, 2
    %v14 = vld [vmem:[%s13] ss:$4 sm:$0xff]
    %15 = vrot.lane.b32.xlu0 %v14, 64
    %v16 = vpop.permute.xlu0 %15
    %vm17 = vcmask 785920
    %18 = vst.msk [vmem:[#allocation0] ss:$8 sm:$0xf] %vm17, %v16
    %19 = vst.msk [vmem:[#allocation0] ss:$8 sm:$0xf0] %vm17, %v16
    %s20 = scalar_lea.vmem %s0, 1
    %v21 = vld [vmem:[%s20] ss:$4 sm:$0xff]
    %22 = vrot.lane.b32.xlu0 %v21, 32
    %v23 = vpop.permute.xlu0 %22
    %vm24 = vcmask 523520
    %25 = vst.msk [vmem:[#allocation0] ss:$8 sm:$0xf] %vm24, %v23
    %26 = vst.msk [vmem:[#allocation0] ss:$8 sm:$0xf0] %vm24, %v23
    %s28 = sshllo.u32 0, 1
    %v30 = vld [vmem:[#allocation0] sm:%s28]
    %s31 = sshllo.u32 0, 1
    %32 = vst [vmem:[%s1] sm:%s31] %v30
    %s33 = scalar_lea.vmem [#allocation0], 8
    %v34 = vld [vmem:[%s33] sm:%s28]
    %s35 = sshllo.u32 0, 1
    %s36 = scalar_lea.vmem %s1, 1
    %37 = vst [vmem:[%s36] sm:%s35] %v34
    %s38 = scalar_lea.vmem [#allocation0], 16
    %v39 = vld [vmem:[%s38] sm:%s28]
    %s40 = sshllo.u32 0, 1
    %s41 = smul.addr 1, 2
    %s42 = scalar_lea.vmem %s1, %s41
    %43 = vst [vmem:[%s42] sm:%s40] %v39
    %s44 = scalar_lea.vmem [#allocation0], 24
    %v45 = vld [vmem:[%s44] sm:%s28]
    %s46 = sshllo.u32 0, 1
    %s47 = smul.addr 1, 3
    %s48 = scalar_lea.vmem %s1, %s47
    %49 = vst [vmem:[%s48] sm:%s46] %v45
    %s50 = scalar_lea.vmem [#allocation0], 32
    %v51 = vld [vmem:[%s50] sm:%s28]
    %s52 = sshllo.u32 0, 1
    %s53 = smul.addr 1, 4
    %s54 = scalar_lea.vmem %s1, %s53
    %55 = vst [vmem:[%s54] sm:%s52] %v51
    %s56 = scalar_lea.vmem [#allocation0], 40
    %v57 = vld [vmem:[%s56] sm:%s28]
    %s58 = sshllo.u32 0, 1
    %s59 = smul.addr 1, 5
    %s60 = scalar_lea.vmem %s1, %s59
    %61 = vst [vmem:[%s60] sm:%s58] %v57
    %s62 = scalar_lea.vmem [#allocation0], 48
    %v63 = vld [vmem:[%s62] sm:%s28]
    %s64 = sshllo.u32 0, 1
    %s65 = smul.addr 1, 6
    %s66 = scalar_lea.vmem %s1, %s65
    %67 = vst [vmem:[%s66] sm:%s64] %v63
    %s68 = scalar_lea.vmem [#allocation0], 56
    %v69 = vld [vmem:[%s68] sm:%s28]
    %s70 = sshllo.u32 0, 1
    %s71 = smul.addr 1, 7
    %s72 = scalar_lea.vmem %s1, %s71
    %73 = vst [vmem:[%s72] sm:%s70] %v69

// kernel: dilation_convolution_1d_unit.1
$region0: #{dilation_convolution_1d_unit.1}
  #allocation0 [shape = 'u32[]', space=smem, size = 0x4, offset = 0x4, fixed_abs, tag = 'smem constant byte address 0x4 - core index']
  #allocation1 [shape = 'u32[144,128]{1,0:T(1,128)}', space=vmem, size = 0x12000, scoped, tag = 'internal scratch']
  %s0 = inlined_call_operand.vmem [shape: bf16[2,4,40], index: 0, kind: input, shape index: {}]
  %s1 = inlined_call_operand.vmem [shape: bf16[40,1024], index: 1, kind: input, shape index: {}]
  %s2 = inlined_call_operand.vmem [shape: f32[1024,32], index: 2, kind: input, shape index: {}]
  %s3 = inlined_call_operand.vmem [shape: f32[32,1024], index: 3, kind: input, shape index: {}]
  %s4 = inlined_call_operand.vmem [shape: f32[1,1024], index: 4, kind: input, shape index: {}]
  %s5 = inlined_call_operand.vmem [shape: f32[1,1024], index: 5, kind: input, shape index: {}]
  %s6 = inlined_call_operand.vmem [shape: f32[2,4,1024], index: 6, kind: output, shape index: {}]
  %s7 = sld [smem:[#allocation0]]
  $region57: #{dilation_convolution_1d_unit.1} parent=0
    _
  %s9 = ssub.s32 1, %s7
  %s10 = scalar_select 0, %s9, %s7
  loop: start=0, step=1, limit=4
  $region2: #{dilation_convolution_1d_unit.1} parent=0 // loop_pre_header
    _
  $region3: #{dilation_convolution_1d_unit.1} parent=0 // loop_header
    %s12 = sphi 0, %s16
    %p13 = scmp.ge.s32.totalorder %s12, 4
    %s22 = sphi 0, %s24
    %s25 = sphi 0, %s22
    %s26 = sphi 0, %s25
    %s42 = sphi 0, %s26
    %s46 = sphi 0, %s46
    %s48 = sphi 0, %s46
    %s49 = sphi 0, %s48
    %s63 = sphi 0, %s49
    %s67 = sphi 0, %s67
    %s69 = sphi 0, %s67
    %s70 = sphi 0, %s69
    %s84 = sphi 0, %s70
    %s88 = sphi 0, %s88
    %s90 = sphi 0, %s88
    %s91 = sphi 0, %s90
    %s105 = sphi 0, %s91
    %s109 = sphi 0, %s109
    %s111 = sphi 0, %s109
    %s112 = sphi 0, %s111
    %s126 = sphi 0, %s112
    %s130 = sphi 0, %s130
    %s132 = sphi 0, %s130
    %s133 = sphi 0, %s132
    %s147 = sphi 0, %s133
    %s153 = sphi 0, %s155
    %s156 = sphi 0, %s153
    %s157 = sphi 0, %s156
    %s173 = sphi 0, %s157
  $region4: #{dilation_convolution_1d_unit.1} parent=0 // loop_header_branch
    %15 = sbr.rel (%p13) target = $region8
  $region5: #{dilation_convolution_1d_unit.1} parent=0 // loop_body
    %s17 = ssub.s32 %s12, 1
    %s18 = ssub.s32 %s12, 2
    %s19 = sadd.s32 %s12, 1
    %s20 = ssub.s32 %s12, %s19
    %p21 = scmp.eq.s32.totalorder %s20, 0
    %s23 = sadd.s32 %s22, 1
    %s24 = scalar_select %p21, %s22, %s23
    %p27 = pneg %p21
    %p28 = scmp.eq.s32.totalorder %s12, 1
    %p29 = por %p27, %p28
    %p30 = scmp.ne.s32.totalorder %s22, %s25
    %p31 = scmp.eq.s32.totalorder %s12, 0
    %p32 = por %p30, %p31
    %p33 = scmp.ne.s32.totalorder %s22, %s25
    %p34 = scmp.eq.s32.totalorder %s17, 1
    %p35 = por %p33, %p34
    %p36 = scmp.ne.s32.totalorder %s25, %s26
    %p37 = scmp.eq.s32.totalorder %s17, 0
    %p38 = por %p36, %p37
    %p39 = scmp.ne.s32.totalorder %s25, %s26
    %p40 = scmp.eq.s32.totalorder %s18, 1
    %p41 = por %p39, %p40
    %p43 = scmp.ne.s32.totalorder %s26, %s42
    %p44 = scmp.eq.s32.totalorder %s18, 0
    %p45 = por %p43, %p44
    %s47 = sadd.s32 %s46, 1
    %p50 = scmp.eq.s32.totalorder %s12, 1
    %p51 = scmp.ne.s32.totalorder %s46, %s48
    %p52 = scmp.eq.s32.totalorder %s12, 0
    %p53 = por %p51, %p52
    %p54 = scmp.ne.s32.totalorder %s46, %s48
    %p55 = scmp.eq.s32.totalorder %s17, 1
    %p56 = por %p54, %p55
    %p57 = scmp.ne.s32.totalorder %s48, %s49
    %p58 = scmp.eq.s32.totalorder %s17, 0
    %p59 = por %p57, %p58
    %p60 = scmp.ne.s32.totalorder %s48, %s49
    %p61 = scmp.eq.s32.totalorder %s18, 1
    %p62 = por %p60, %p61
    %p64 = scmp.ne.s32.totalorder %s49, %s63
    %p65 = scmp.eq.s32.totalorder %s18, 0
    %p66 = por %p64, %p65
    %s68 = sadd.s32 %s67, 1
    %p71 = scmp.eq.s32.totalorder %s12, 1
    %p72 = scmp.ne.s32.totalorder %s67, %s69
    %p73 = scmp.eq.s32.totalorder %s12, 0
    %p74 = por %p72, %p73
    %p75 = scmp.ne.s32.totalorder %s67, %s69
    %p76 = scmp.eq.s32.totalorder %s17, 1
    %p77 = por %p75, %p76
    %p78 = scmp.ne.s32.totalorder %s69, %s70
    %p79 = scmp.eq.s32.totalorder %s17, 0
    %p80 = por %p78, %p79
    %p81 = scmp.ne.s32.totalorder %s69, %s70
    %p82 = scmp.eq.s32.totalorder %s18, 1
    %p83 = por %p81, %p82
    %p85 = scmp.ne.s32.totalorder %s70, %s84
    %p86 = scmp.eq.s32.totalorder %s18, 0
    %p87 = por %p85, %p86
    %s89 = sadd.s32 %s88, 1
    %p92 = scmp.eq.s32.totalorder %s12, 1
    %p93 = scmp.ne.s32.totalorder %s88, %s90
    %p94 = scmp.eq.s32.totalorder %s12, 0
    %p95 = por %p93, %p94
    %p96 = scmp.ne.s32.totalorder %s88, %s90
    %p97 = scmp.eq.s32.totalorder %s17, 1
    %p98 = por %p96, %p97
    %p99 = scmp.ne.s32.totalorder %s90, %s91
    %p100 = scmp.eq.s32.totalorder %s17, 0
    %p101 = por %p99, %p100
    %p102 = scmp.ne.s32.totalorder %s90, %s91
    %p103 = scmp.eq.s32.totalorder %s18, 1
    %p104 = por %p102, %p103
    %p106 = scmp.ne.s32.totalorder %s91, %s105
    %p107 = scmp.eq.s32.totalorder %s18, 0
    %p108 = por %p106, %p107
    %s110 = sadd.s32 %s109, 1
    %p113 = scmp.eq.s32.totalorder %s12, 1
    %p114 = scmp.ne.s32.totalorder %s109, %s111
    %p115 = scmp.eq.s32.totalorder %s12, 0
    %p116 = por %p114, %p115
    %p117 = scmp.ne.s32.totalorder %s109, %s111
    %p118 = scmp.eq.s32.totalorder %s17, 1
    %p119 = por %p117, %p118
    %p120 = scmp.ne.s32.totalorder %s111, %s112
    %p121 = scmp.eq.s32.totalorder %s17, 0
    %p122 = por %p120, %p121
    %p123 = scmp.ne.s32.totalorder %s111, %s112
    %p124 = scmp.eq.s32.totalorder %s18, 1
    %p125 = por %p123, %p124
    %p127 = scmp.ne.s32.totalorder %s112, %s126
    %p128 = scmp.eq.s32.totalorder %s18, 0
    %p129 = por %p127, %p128
    %s131 = sadd.s32 %s130, 1
    %p134 = scmp.eq.s32.totalorder %s12, 1
    %p135 = scmp.ne.s32.totalorder %s130, %s132
    %p136 = scmp.eq.s32.totalorder %s12, 0
    %p137 = por %p135, %p136
    %p138 = scmp.ne.s32.totalorder %s130, %s132
    %p139 = scmp.eq.s32.totalorder %s17, 1
    %p140 = por %p138, %p139
    %p141 = scmp.ne.s32.totalorder %s132, %s133
    %p142 = scmp.eq.s32.totalorder %s17, 0
    %p143 = por %p141, %p142
    %p144 = scmp.ne.s32.totalorder %s132, %s133
    %p145 = scmp.eq.s32.totalorder %s18, 1
    %p146 = por %p144, %p145
    %p148 = scmp.ne.s32.totalorder %s133, %s147
    %p149 = scmp.eq.s32.totalorder %s18, 0
    %p150 = por %p148, %p149
    %s151 = ssub.s32 %s12, %s19
    %p152 = scmp.eq.s32.totalorder %s151, 0
    %s154 = sadd.s32 %s153, 1
    %s155 = scalar_select %p152, %s153, %s154
    %p158 = pneg %p152
    %p159 = scmp.eq.s32.totalorder %s12, 1
    %p160 = por %p158, %p159
    %p161 = scmp.ne.s32.totalorder %s153, %s156
    %p162 = scmp.eq.s32.totalorder %s12, 0
    %p163 = por %p161, %p162
    %p164 = scmp.ne.s32.totalorder %s153, %s156
    %p165 = scmp.eq.s32.totalorder %s17, 1
    %p166 = por %p164, %p165
    %p167 = scmp.ne.s32.totalorder %s156, %s157
    %p168 = scmp.eq.s32.totalorder %s17, 0
    %p169 = por %p167, %p168
    %p170 = scmp.ne.s32.totalorder %s156, %s157
    %p171 = scmp.eq.s32.totalorder %s18, 1
    %p172 = por %p170, %p171
    %p174 = scmp.ne.s32.totalorder %s157, %s173
    %p175 = scmp.eq.s32.totalorder %s18, 0
    %p176 = por %p174, %p175
    %p177 = scmp.le.s32.totalorder 1, %s12
    %p178 = scmp.lt.s32.totalorder %s12, 3
    %p179 = pnand %p177, %p178
    %p180 = pneg %p179
    // Predicated region
    $region9: #{dilation_convolution_1d_unit.1} parent=5 // pred_check
      _
    $region10: #{dilation_convolution_1d_unit.1} parent=5 // pred_check_branch
      %182 = sbr.rel (%p179) target = $region12
    $region11: #{dilation_convolution_1d_unit.1} parent=5 // pred_region
      %s183 = ssub.s32 %s12, 1
      // Predicated region
      $region13: #{dilation_convolution_1d_unit.1} parent=11 // pred_check
        %p184 = pneg %p59
      $region14: #{dilation_convolution_1d_unit.1} parent=11 // pred_check_branch
        %186 = sbr.rel (%p184) target = $region16
      $region15: #{dilation_convolution_1d_unit.1} parent=11 // pred_region
        _
      $region16: #{dilation_convolution_1d_unit.1} parent=11 // pred_fallthru
        _
      // Predicated region
      $region17: #{dilation_convolution_1d_unit.1} parent=11 // pred_check
        %p187 = pneg %p80
      $region18: #{dilation_convolution_1d_unit.1} parent=11 // pred_check_branch
        %189 = sbr.rel (%p187) target = $region20
      $region19: #{dilation_convolution_1d_unit.1} parent=11 // pred_region
        _
      $region20: #{dilation_convolution_1d_unit.1} parent=11 // pred_fallthru
        _
      // Predicated region
      $region21: #{dilation_convolution_1d_unit.1} parent=11 // pred_check
        %p190 = pneg %p101
      $region22: #{dilation_convolution_1d_unit.1} parent=11 // pred_check_branch
        %192 = sbr.rel (%p190) target = $region24
      $region23: #{dilation_convolution_1d_unit.1} parent=11 // pred_region
        _
      $region24: #{dilation_convolution_1d_unit.1} parent=11 // pred_fallthru
        _
      // Predicated region
      $region25: #{dilation_convolution_1d_unit.1} parent=11 // pred_check
        %p193 = pneg %p122
      $region26: #{dilation_convolution_1d_unit.1} parent=11 // pred_check_branch
        %195 = sbr.rel (%p193) target = $region28
      $region27: #{dilation_convolution_1d_unit.1} parent=11 // pred_region
        _
      $region28: #{dilation_convolution_1d_unit.1} parent=11 // pred_fallthru
        _
      // Predicated region
      $region29: #{dilation_convolution_1d_unit.1} parent=11 // pred_check
        %p196 = pneg %p143
      $region30: #{dilation_convolution_1d_unit.1} parent=11 // pred_check_branch
        %198 = sbr.rel (%p196) target = $region32
      $region31: #{dilation_convolution_1d_unit.1} parent=11 // pred_region
        _
      $region32: #{dilation_convolution_1d_unit.1} parent=11 // pred_fallthru
        _
    $region12: #{dilation_convolution_1d_unit.1} parent=5 // pred_fallthru
      _
    %p199 = scmp.lt.s32.totalorder %s12, 2
    // Predicated region
    $region33: #{dilation_convolution_1d_unit.1} parent=5 // pred_check
      %p200 = pneg %p199
    $region34: #{dilation_convolution_1d_unit.1} parent=5 // pred_check_branch
      %202 = sbr.rel (%p200) target = $region36
    $region35: #{dilation_convolution_1d_unit.1} parent=5 // pred_region
      // Predicated region
      $region37: #{dilation_convolution_1d_unit.1} parent=35 // pred_check
        %p203 = pneg %p32
      $region38: #{dilation_convolution_1d_unit.1} parent=35 // pred_check_branch
        %205 = sbr.rel (%p203) target = $region40
      $region39: #{dilation_convolution_1d_unit.1} parent=35 // pred_region
        %p206 = scmp.lt.s32.totalorder %s12, 1
        %s207 = scalar_select %p206, %s12, 1
        %s208 = smul.addr %s207, 2
        %s209 = scalar_lea.vmem %s0, %s208
      $region40: #{dilation_convolution_1d_unit.1} parent=35 // pred_fallthru
        _
    $region36: #{dilation_convolution_1d_unit.1} parent=5 // pred_fallthru
      _
    %p210 = scmp.le.s32.totalorder 1, %s12
    %p211 = scmp.lt.s32.totalorder %s12, 3
    %p212 = pnand %p210, %p211
    %p213 = pneg %p212
    // Predicated region
    $region41: #{dilation_convolution_1d_unit.1} parent=5 // pred_check
      _
    $region42: #{dilation_convolution_1d_unit.1} parent=5 // pred_check_branch
      %215 = sbr.rel (%p212) target = $region44
    $region43: #{dilation_convolution_1d_unit.1} parent=5 // pred_region
      %s216 = ssub.s32 %s12, 1
      %p217 = scmp.lt.s32.totalorder %s17, 1
      %s218 = scalar_select %p217, %s17, 1
      %s219 = smul.addr %s218, 2
      %s220 = scalar_lea.vmem %s0, %s219
      %p221 = pneg %p38
      %p222 = pneg %p35
      %p223 = pneg %p59
      %p224 = pneg %p56
      %p225 = pneg %p80
      %p226 = pneg %p77
      %p227 = pneg %p101
      %p228 = pneg %p98
      %p229 = pneg %p122
      %p230 = pneg %p119
      %p231 = pneg %p143
      %p232 = pneg %p140
      %p233 = pneg %p169
      %p234 = pneg %p166
      %p235 = scmp.lt.s32.totalorder %s17, 1
      %s236 = scalar_select %p235, %s17, 1
      %s237 = smul.addr %s236, 8
      %s238 = smul.addr %s237, 4
      %s239 = scalar_lea.vmem %s6, %s238
      %p240 = scmp.lt.s32.totalorder %s17, 1
      %s241 = scalar_select %p240, %s17, 1
      %s242 = smul.addr %s241, 2
      %s243 = scalar_lea.vmem %s0, %s242
      %p244 = scmp.lt.s32.totalorder %s17, 1
      %s245 = scalar_select %p244, %s17, 1
      %s246 = smul.addr %s245, 8
      %s247 = smul.addr %s246, 4
      %s248 = scalar_lea.vmem %s6, %s247
      %v250 = vld [vmem:[%s243] sm:$0x3]
      %v251 = vld [vmem:[%s1] sm:$0xff]
      %v252 = vld [vmem:[%s1 + $0x8] sm:$0xff]
      %v253 = vld [vmem:[%s1 + $0x10] sm:$0xff]
      %v254 = vld [vmem:[%s1 + $0x18] sm:$0xff]
      %v255 = vld [vmem:[%s1 + $0x20] sm:$0xff]
      %v256 = vld [vmem:[%s1 + $0x28] sm:$0xff]
      %v257 = vld [vmem:[%s1 + $0x30] sm:$0xff]
      %v258 = vld [vmem:[%s1 + $0x38] sm:$0xff]
      %v259 = vld [vmem:[%s1 + $0x40] sm:$0xff]
      %v260 = vld [vmem:[%s1 + $0x48] sm:$0xff]
      %v261 = vld [vmem:[%s1 + $0x50] sm:$0xff]
      %v262 = vld [vmem:[%s1 + $0x58] sm:$0xff]
      %v263 = vld [vmem:[%s1 + $0x60] sm:$0xff]
      %v264 = vld [vmem:[%s1 + $0x68] sm:$0xff]
      %v265 = vld [vmem:[%s1 + $0x70] sm:$0xff]
      %v266 = vld [vmem:[%s1 + $0x78] sm:$0xff]
      %v267 = vld [vmem:[%s1 + $0x80] sm:$0xff]
      %v268 = vld [vmem:[%s1 + $0x88] sm:$0xff]
      %v269 = vld [vmem:[%s1 + $0x90] sm:$0xff]
      %v270 = vld [vmem:[%s1 + $0x98] sm:$0xff]
      %v291 = vunpack.c.l.b16 %v251
      %v292 = vunpack.c.h.b16 %v251
      %v293 = vunpack.c.l.b16 %v252
      %v294 = vunpack.c.h.b16 %v252
      %v295 = vunpack.c.l.b16 %v253
      %v296 = vunpack.c.h.b16 %v253
      %v297 = vunpack.c.l.b16 %v254
      %v298 = vunpack.c.h.b16 %v254
      %v299 = vunpack.c.l.b16 %v255
      %v300 = vunpack.c.h.b16 %v255
      %v301 = vunpack.c.l.b16 %v256
      %v302 = vunpack.c.h.b16 %v256
      %v303 = vunpack.c.l.b16 %v257
      %v304 = vunpack.c.h.b16 %v257
      %v305 = vunpack.c.l.b16 %v258
      %v306 = vunpack.c.h.b16 %v258
      %v307 = vunpack.c.l.b16 %v259
      %v308 = vunpack.c.h.b16 %v259
      %v309 = vunpack.c.l.b16 %v260
      %v310 = vunpack.c.h.b16 %v260
      %v311 = vunpack.c.l.b16 %v261
      %v312 = vunpack.c.h.b16 %v261
      %v313 = vunpack.c.l.b16 %v262
      %v314 = vunpack.c.h.b16 %v262
      %v315 = vunpack.c.l.b16 %v263
      %v316 = vunpack.c.h.b16 %v263
      %v317 = vunpack.c.l.b16 %v264
      %v318 = vunpack.c.h.b16 %v264
      %v319 = vunpack.c.l.b16 %v265
      %v320 = vunpack.c.h.b16 %v265
      %v321 = vunpack.c.l.b16 %v266
      %v322 = vunpack.c.h.b16 %v266
      %v323 = vunpack.c.l.b16 %v267
      %v324 = vunpack.c.h.b16 %v267
      %v325 = vunpack.c.l.b16 %v268
      %v326 = vunpack.c.h.b16 %v268
      %v327 = vunpack.c.l.b16 %v269
      %v328 = vunpack.c.h.b16 %v269
      %v329 = vunpack.c.l.b16 %v270
      %v330 = vunpack.c.h.b16 %v270
      %v331 = vpack.c.b16 %v299, %v291
      %v332 = vpack.c.b16 %v300, %v292
      %v333 = vpack.c.b16 %v301, %v293
      %v334 = vpack.c.b16 %v302, %v294
      %v335 = vpack.c.b16 %v303, %v295
      %v336 = vpack.c.b16 %v304, %v296
      %v337 = vpack.c.b16 %v305, %v297
      %v338 = vpack.c.b16 %v306, %v298
      %v339 = vpack.c.b16 %v315, %v307
      %v340 = vpack.c.b16 %v316, %v308
      %v341 = vpack.c.b16 %v317, %v309
      %v342 = vpack.c.b16 %v318, %v310
      %v343 = vpack.c.b16 %v319, %v311
      %v344 = vpack.c.b16 %v320, %v312
      %v345 = vpack.c.b16 %v321, %v313
      %v346 = vpack.c.b16 %v322, %v314
      %v347 = vpack.c.b16 %v323, %v323
      %v348 = vpack.c.b16 %v324, %v324
      %v349 = vpack.c.b16 %v325, %v325
      %v350 = vpack.c.b16 %v326, %v326
      %v351 = vpack.c.b16 %v327, %v327
      %v352 = vpack.c.b16 %v328, %v328
      %v353 = vpack.c.b16 %v329, %v329
      %v354 = vpack.c.b16 %v330, %v330
      %vm371 = vcmask 326656
      %v373 = vsel %vm371, %v250, 0
      %vm375 = vcmask 1043456
      %v377 = vsel %vm375, %v347, 0
      %v380 = vsel %vm375, %v348, 0
      %v383 = vsel %vm375, %v349, 0
      %v386 = vsel %vm375, %v350, 0
      %v389 = vsel %vm375, %v351, 0
      %v392 = vsel %vm375, %v352, 0
      %v395 = vsel %vm375, %v353, 0
      %v398 = vsel %vm375, %v354, 0
      %400 = vmatprep.subr.bf16.mxu0 %v332
      %401 = vmatpush1.bf16.msra.mxu0 %v331
      %402 = vmatprep.subr.bf16.mxu0 %v340
      %403 = vmatpush1.bf16.msra.mxu0 %v339
      %404 = vmatprep.subr.bf16.mxu0 %v380
      %405 = vmatpush1.bf16.msra.mxu0 %v377
      %406 = vmatprep.subr.bf16.mxu0 0
      %407 = vmatpush1.bf16.msra.mxu0 0
      %408 = vmatprep.subr.bf16.mxu0 0
      %409 = vmatpush1.bf16.msra.mxu0 0
      %410 = vmatprep.subr.bf16.mxu0 0
      %411 = vmatpush1.bf16.msra.mxu0 0
      %412 = vmatprep.subr.bf16.mxu0 0
      %413 = vmatpush1.bf16.msra.mxu0 0
      %414 = vmatprep.subr.bf16.mxu0 0
      %415 = vmatpush1.bf16.msra.mxu0 0
      %416 = vmatprep.subr.bf16.mxu0 0
      %417 = vmatpush1.bf16.msra.mxu0 0
      %418 = vmatprep.subr.bf16.mxu0 0
      %419 = vmatpush1.bf16.msra.mxu0 0
      %420 = vmatprep.subr.bf16.mxu0 0
      %421 = vmatpush1.bf16.msra.mxu0 0
      %422 = vmatprep.subr.bf16.mxu0 0
      %423 = vmatpush1.bf16.msra.mxu0 0
      %424 = vmatprep.subr.bf16.mxu0 0
      %425 = vmatpush1.bf16.msra.mxu0 0
      %426 = vmatprep.subr.bf16.mxu0 0
      %427 = vmatpush1.bf16.msra.mxu0 0
      %428 = vmatprep.subr.bf16.mxu0 0
      %429 = vmatpush1.bf16.msra.mxu0 0
      %430 = vmatprep.subr.bf16.mxu0 0
      %431 = vmatpush1.bf16.msra.mxu0 0
      %432 = vmatprep.mubr.bf16.mxu0 0
      %433 = vmatmul.mubr.bf16.gmra.mrb[0].mxu0 %v373
      %v434 = vpop.f32.mrb[0].mxu0
      %v435 = vadd.f32 0.0, %v434
      %v436 = vpop.f32.mrb[0].mxu0
      %v437 = vadd.f32 0.0, %v436
      %v438 = vpop.f32.mrb[0].mxu0
      %v439 = vpop.f32.mrb[0].mxu0
      %440 = vdwg.mxu0
      %441 = vmatprep.subr.bf16.mxu0 %v334
      %442 = vmatpush1.bf16.msra.mxu0 %v333
      %443 = vmatprep.subr.bf16.mxu0 %v342
      %444 = vmatpush1.bf16.msra.mxu0 %v341
      %445 = vmatprep.subr.bf16.mxu0 %v386
      %446 = vmatpush1.bf16.msra.mxu0 %v383
      %447 = vmatprep.subr.bf16.mxu0 0
      %448 = vmatpush1.bf16.msra.mxu0 0
      %449 = vmatprep.subr.bf16.mxu0 0
      %450 = vmatpush1.bf16.msra.mxu0 0
      %451 = vmatprep.subr.bf16.mxu0 0
      %452 = vmatpush1.bf16.msra.mxu0 0
      %453 = vmatprep.subr.bf16.mxu0 0
      %454 = vmatpush1.bf16.msra.mxu0 0
      %455 = vmatprep.subr.bf16.mxu0 0
      %456 = vmatpush1.bf16.msra.mxu0 0
      %457 = vmatprep.subr.bf16.mxu0 0
      %458 = vmatpush1.bf16.msra.mxu0 0
      %459 = vmatprep.subr.bf16.mxu0 0
      %460 = vmatpush1.bf16.msra.mxu0 0
      %461 = vmatprep.subr.bf16.mxu0 0
      %462 = vmatpush1.bf16.msra.mxu0 0
      %463 = vmatprep.subr.bf16.mxu0 0
      %464 = vmatpush1.bf16.msra.mxu0 0
      %465 = vmatprep.subr.bf16.mxu0 0
      %466 = vmatpush1.bf16.msra.mxu0 0
      %467 = vmatprep.subr.bf16.mxu0 0
      %468 = vmatpush1.bf16.msra.mxu0 0
      %469 = vmatprep.subr.bf16.mxu0 0
      %470 = vmatpush1.bf16.msra.mxu0 0
      %471 = vmatprep.subr.bf16.mxu0 0
      %472 = vmatpush1.bf16.msra.mxu0 0
      %473 = vmatprep.mubr.bf16.mxu0 0
      %474 = vmatmul.mubr.bf16.gmra.mrb[0].mxu0 %v373
      %v475 = vpop.f32.mrb[0].mxu0
      %v476 = vadd.f32 0.0, %v475
      %v477 = vpop.f32.mrb[0].mxu0
      %v478 = vadd.f32 0.0, %v477
      %v479 = vpop.f32.mrb[0].mxu0
      %v480 = vpop.f32.mrb[0].mxu0
      %481 = vdwg.mxu0
      %482 = vmatprep.subr.bf16.mxu0 %v336
      %483 = vmatpush1.bf16.msra.mxu0 %v335
      %484 = vmatprep.subr.bf16.mxu0 %v344
      %485 = vmatpush1.bf16.msra.mxu0 %v343
      %486 = vmatprep.subr.bf16.mxu0 %v392
      %487 = vmatpush1.bf16.msra.mxu0 %v389
      %488 = vmatprep.subr.bf16.mxu0 0
      %489 = vmatpush1.bf16.msra.mxu0 0
      %490 = vmatprep.subr.bf16.mxu0 0
      %491 = vmatpush1.bf16.msra.mxu0 0
      %492 = vmatprep.subr.bf16.mxu0 0
      %493 = vmatpush1.bf16.msra.mxu0 0
      %494 = vmatprep.subr.bf16.mxu0 0
      %495 = vmatpush1.bf16.msra.mxu0 0
      %496 = vmatprep.subr.bf16.mxu0 0
      %497 = vmatpush1.bf16.msra.mxu0 0
      %498 = vmatprep.subr.bf16.mxu0 0
      %499 = vmatpush1.bf16.msra.mxu0 0
      %500 = vmatprep.subr.bf16.mxu0 0
      %501 = vmatpush1.bf16.msra.mxu0 0
      %502 = vmatprep.subr.bf16.mxu0 0
      %503 = vmatpush1.bf16.msra.mxu0 0
      %504 = vmatprep.subr.bf16.mxu0 0
      %505 = vmatpush1.bf16.msra.mxu0 0
      %506 = vmatprep.subr.bf16.mxu0 0
      %507 = vmatpush1.bf16.msra.mxu0 0
      %508 = vmatprep.subr.bf16.mxu0 0
      %509 = vmatpush1.bf16.msra.mxu0 0
      %510 = vmatprep.subr.bf16.mxu0 0
      %511 = vmatpush1.bf16.msra.mxu0 0
      %512 = vmatprep.subr.bf16.mxu0 0
      %513 = vmatpush1.bf16.msra.mxu0 0
      %514 = vmatprep.mubr.bf16.mxu0 0
      %515 = vmatmul.mubr.bf16.gmra.mrb[0].mxu0 %v373
      %v516 = vpop.f32.mrb[0].mxu0
      %v517 = vadd.f32 0.0, %v516
      %v518 = vpop.f32.mrb[0].mxu0
      %v519 = vadd.f32 0.0, %v518
      %v520 = vpop.f32.mrb[0].mxu0
      %v521 = vpop.f32.mrb[0].mxu0
      %522 = vdwg.mxu0
      %523 = vmatprep.subr.bf16.mxu0 %v338
      %524 = vmatpush1.bf16.msra.mxu0 %v337
      %525 = vmatprep.subr.bf16.mxu0 %v346
      %526 = vmatpush1.bf16.msra.mxu0 %v345
      %527 = vmatprep.subr.bf16.mxu0 %v398
      %528 = vmatpush1.bf16.msra.mxu0 %v395
      %529 = vmatprep.subr.bf16.mxu0 0
      %530 = vmatpush1.bf16.msra.mxu0 0
      %531 = vmatprep.subr.bf16.mxu0 0
      %532 = vmatpush1.bf16.msra.mxu0 0
      %533 = vmatprep.subr.bf16.mxu0 0
      %534 = vmatpush1.bf16.msra.mxu0 0
      %535 = vmatprep.subr.bf16.mxu0 0
      %536 = vmatpush1.bf16.msra.mxu0 0
      %537 = vmatprep.subr.bf16.mxu0 0
      %538 = vmatpush1.bf16.msra.mxu0 0
      %539 = vmatprep.subr.bf16.mxu0 0
      %540 = vmatpush1.bf16.msra.mxu0 0
      %541 = vmatprep.subr.bf16.mxu0 0
      %542 = vmatpush1.bf16.msra.mxu0 0
      %543 = vmatprep.subr.bf16.mxu0 0
      %544 = vmatpush1.bf16.msra.mxu0 0
      %545 = vmatprep.subr.bf16.mxu0 0
      %546 = vmatpush1.bf16.msra.mxu0 0
      %547 = vmatprep.subr.bf16.mxu0 0
      %548 = vmatpush1.bf16.msra.mxu0 0
      %549 = vmatprep.subr.bf16.mxu0 0
      %550 = vmatpush1.bf16.msra.mxu0 0
      %551 = vmatprep.subr.bf16.mxu0 0
      %552 = vmatpush1.bf16.msra.mxu0 0
      %553 = vmatprep.subr.bf16.mxu0 0
      %554 = vmatpush1.bf16.msra.mxu0 0
      %555 = vmatprep.mubr.bf16.mxu0 0
      %556 = vmatmul.mubr.bf16.gmra.mrb[0].mxu0 %v373
      %v557 = vpop.f32.mrb[0].mxu0
      %v558 = vadd.f32 0.0, %v557
      %v559 = vpop.f32.mrb[0].mxu0
      %v560 = vadd.f32 0.0, %v559
      %v561 = vpop.f32.mrb[0].mxu0
      %v562 = vpop.f32.mrb[0].mxu0
      %563 = vdwg.mxu0
      %v564 = vld [vmem:[%s2] sm:$0xff]
      %v565 = vld [vmem:[%s2 + $0x8] sm:$0xff]
      %v566 = vld [vmem:[%s2 + $0x10] sm:$0xff]
      %v567 = vld [vmem:[%s2 + $0x18] sm:$0xff]
      %v568 = vld [vmem:[%s2 + $0x20] sm:$0xff]
      %v569 = vld [vmem:[%s2 + $0x28] sm:$0xff]
      %v570 = vld [vmem:[%s2 + $0x30] sm:$0xff]
      %v571 = vld [vmem:[%s2 + $0x38] sm:$0xff]
      %v572 = vld [vmem:[%s2 + $0x40] sm:$0xff]
      %v573 = vld [vmem:[%s2 + $0x48] sm:$0xff]
      %v574 = vld [vmem:[%s2 + $0x50] sm:$0xff]
      %v575 = vld [vmem:[%s2 + $0x58] sm:$0xff]
      %v576 = vld [vmem:[%s2 + $0x60] sm:$0xff]
      %v577 = vld [vmem:[%s2 + $0x68] sm:$0xff]
      %v578 = vld [vmem:[%s2 + $0x70] sm:$0xff]
      %v579 = vld [vmem:[%s2 + $0x78] sm:$0xff]
      %v580 = vld [vmem:[%s2 + $0x80] sm:$0xff]
      %v581 = vld [vmem:[%s2 + $0x88] sm:$0xff]
      %v582 = vld [vmem:[%s2 + $0x90] sm:$0xff]
      %v583 = vld [vmem:[%s2 + $0x98] sm:$0xff]
      %v584 = vld [vmem:[%s2 + $0xa0] sm:$0xff]
      %v585 = vld [vmem:[%s2 + $0xa8] sm:$0xff]
      %v586 = vld [vmem:[%s2 + $0xb0] sm:$0xff]
      %v587 = vld [vmem:[%s2 + $0xb8] sm:$0xff]
      %v588 = vld [vmem:[%s2 + $0xc0] sm:$0xff]
      %v589 = vld [vmem:[%s2 + $0xc8] sm:$0xff]
      %v590 = vld [vmem:[%s2 + $0xd0] sm:$0xff]
      %v591 = vld [vmem:[%s2 + $0xd8] sm:$0xff]
      %v592 = vld [vmem:[%s2 + $0xe0] sm:$0xff]
      %v593 = vld [vmem:[%s2 + $0xe8] sm:$0xff]
      %v594 = vld [vmem:[%s2 + $0xf0] sm:$0xff]
      %v595 = vld [vmem:[%s2 + $0xf8] sm:$0xff]
      %v596 = vld [vmem:[%s2 + $0x100] sm:$0xff]
      %v597 = vld [vmem:[%s2 + $0x108] sm:$0xff]
      %v598 = vld [vmem:[%s2 + $0x110] sm:$0xff]
      %v599 = vld [vmem:[%s2 + $0x118] sm:$0xff]
      %v600 = vld [vmem:[%s2 + $0x120] sm:$0xff]
      %v601 = vld [vmem:[%s2 + $0x128] sm:$0xff]
      %v602 = vld [vmem:[%s2 + $0x130] sm:$0xff]
      %v603 = vld [vmem:[%s2 + $0x138] sm:$0xff]
      %v604 = vld [vmem:[%s2 + $0x140] sm:$0xff]
      %v605 = vld [vmem:[%s2 + $0x148] sm:$0xff]
      %v606 = vld [vmem:[%s2 + $0x150] sm:$0xff]
      %v607 = vld [vmem:[%s2 + $0x158] sm:$0xff]
      %v608 = vld [vmem:[%s2 + $0x160] sm:$0xff]
      %v609 = vld [vmem:[%s2 + $0x168] sm:$0xff]
      %v610 = vld [vmem:[%s2 + $0x170] sm:$0xff]
      %v611 = vld [vmem:[%s2 + $0x178] sm:$0xff]
      %v612 = vld [vmem:[%s2 + $0x180] sm:$0xff]
      %v613 = vld [vmem:[%s2 + $0x188] sm:$0xff]
      %v614 = vld [vmem:[%s2 + $0x190] sm:$0xff]
      %v615 = vld [vmem:[%s2 + $0x198] sm:$0xff]
      %v616 = vld [vmem:[%s2 + $0x1a0] sm:$0xff]
      %v617 = vld [vmem:[%s2 + $0x1a8] sm:$0xff]
      %v618 = vld [vmem:[%s2 + $0x1b0] sm:$0xff]
      %v619 = vld [vmem:[%s2 + $0x1b8] sm:$0xff]
      %v620 = vld [vmem:[%s2 + $0x1c0] sm:$0xff]
      %v621 = vld [vmem:[%s2 + $0x1c8] sm:$0xff]
      %v622 = vld [vmem:[%s2 + $0x1d0] sm:$0xff]
      %v623 = vld [vmem:[%s2 + $0x1d8] sm:$0xff]
      %v624 = vld [vmem:[%s2 + $0x1e0] sm:$0xff]
      %v625 = vld [vmem:[%s2 + $0x1e8] sm:$0xff]
      %v626 = vld [vmem:[%s2 + $0x1f0] sm:$0xff]
      %v627 = vld [vmem:[%s2 + $0x1f8] sm:$0xff]
      %v628 = vld [vmem:[%s2 + $0x200] sm:$0xff]
      %v629 = vld [vmem:[%s2 + $0x208] sm:$0xff]
      %v630 = vld [vmem:[%s2 + $0x210] sm:$0xff]
      %v631 = vld [vmem:[%s2 + $0x218] sm:$0xff]
      %v632 = vld [vmem:[%s2 + $0x220] sm:$0xff]
      %v633 = vld [vmem:[%s2 + $0x228] sm:$0xff]
      %v634 = vld [vmem:[%s2 + $0x230] sm:$0xff]
      %v635 = vld [vmem:[%s2 + $0x238] sm:$0xff]
      %v636 = vld [vmem:[%s2 + $0x240] sm:$0xff]
      %v637 = vld [vmem:[%s2 + $0x248] sm:$0xff]
      %v638 = vld [vmem:[%s2 + $0x250] sm:$0xff]
      %v639 = vld [vmem:[%s2 + $0x258] sm:$0xff]
      %v640 = vld [vmem:[%s2 + $0x260] sm:$0xff]
      %v641 = vld [vmem:[%s2 + $0x268] sm:$0xff]
      %v642 = vld [vmem:[%s2 + $0x270] sm:$0xff]
      %v643 = vld [vmem:[%s2 + $0x278] sm:$0xff]
      %v644 = vld [vmem:[%s2 + $0x280] sm:$0xff]
      %v645 = vld [vmem:[%s2 + $0x288] sm:$0xff]
      %v646 = vld [vmem:[%s2 + $0x290] sm:$0xff]
      %v647 = vld [vmem:[%s2 + $0x298] sm:$0xff]
      %v648 = vld [vmem:[%s2 + $0x2a0] sm:$0xff]
      %v649 = vld [vmem:[%s2 + $0x2a8] sm:$0xff]
      %v650 = vld [vmem:[%s2 + $0x2b0] sm:$0xff]
      %v651 = vld [vmem:[%s2 + $0x2b8] sm:$0xff]
      %v652 = vld [vmem:[%s2 + $0x2c0] sm:$0xff]
      %v653 = vld [vmem:[%s2 + $0x2c8] sm:$0xff]
      %v654 = vld [vmem:[%s2 + $0x2d0] sm:$0xff]
      %v655 = vld [vmem:[%s2 + $0x2d8] sm:$0xff]
      %v656 = vld [vmem:[%s2 + $0x2e0] sm:$0xff]
      %v657 = vld [vmem:[%s2 + $0x2e8] sm:$0xff]
      %v658 = vld [vmem:[%s2 + $0x2f0] sm:$0xff]
      %v659 = vld [vmem:[%s2 + $0x2f8] sm:$0xff]
      %v660 = vld [vmem:[%s2 + $0x300] sm:$0xff]
      %v661 = vld [vmem:[%s2 + $0x308] sm:$0xff]
      %v662 = vld [vmem:[%s2 + $0x310] sm:$0xff]
      %v663 = vld [vmem:[%s2 + $0x318] sm:$0xff]
      %v664 = vld [vmem:[%s2 + $0x320] sm:$0xff]
      %v665 = vld [vmem:[%s2 + $0x328] sm:$0xff]
      %v666 = vld [vmem:[%s2 + $0x330] sm:$0xff]
      %v667 = vld [vmem:[%s2 + $0x338] sm:$0xff]
      %v668 = vld [vmem:[%s2 + $0x340] sm:$0xff]
      %v669 = vld [vmem:[%s2 + $0x348] sm:$0xff]
      %v670 = vld [vmem:[%s2 + $0x350] sm:$0xff]
      %v671 = vld [vmem:[%s2 + $0x358] sm:$0xff]
      %v672 = vld [vmem:[%s2 + $0x360] sm:$0xff]
      %v673 = vld [vmem:[%s2 + $0x368] sm:$0xff]
      %v674 = vld [vmem:[%s2 + $0x370] sm:$0xff]
      %v675 = vld [vmem:[%s2 + $0x378] sm:$0xff]
      %v676 = vld [vmem:[%s2 + $0x380] sm:$0xff]
      %v677 = vld [vmem:[%s2 + $0x388] sm:$0xff]
      %v678 = vld [vmem:[%s2 + $0x390] sm:$0xff]
      %v679 = vld [vmem:[%s2 + $0x398] sm:$0xff]
      %v680 = vld [vmem:[%s2 + $0x3a0] sm:$0xff]
      %v681 = vld [vmem:[%s2 + $0x3a8] sm:$0xff]
      %v682 = vld [vmem:[%s2 + $0x3b0] sm:$0xff]
      %v683 = vld [vmem:[%s2 + $0x3b8] sm:$0xff]
      %v684 = vld [vmem:[%s2 + $0x3c0] sm:$0xff]
      %v685 = vld [vmem:[%s2 + $0x3c8] sm:$0xff]
      %v686 = vld [vmem:[%s2 + $0x3d0] sm:$0xff]
      %v687 = vld [vmem:[%s2 + $0x3d8] sm:$0xff]
      %v688 = vld [vmem:[%s2 + $0x3e0] sm:$0xff]
      %v689 = vld [vmem:[%s2 + $0x3e8] sm:$0xff]
      %v690 = vld [vmem:[%s2 + $0x3f0] sm:$0xff]
      %v691 = vld [vmem:[%s2 + $0x3f8] sm:$0xff]
      %692 = vmatprep.subr.mxu0 0.0
      %693 = vmatpush1.msra.mxu0 %v564
      %694 = vmatprep.subr.mxu0 0.0
      %695 = vmatpush1.msra.mxu0 %v565
      %696 = vmatprep.subr.mxu0 0.0
      %697 = vmatpush1.msra.mxu0 %v566
      %698 = vmatprep.subr.mxu0 0.0
      %699 = vmatpush1.msra.mxu0 %v567
      %700 = vmatprep.subr.mxu0 0.0
      %701 = vmatpush1.msra.mxu0 %v568
      %702 = vmatprep.subr.mxu0 0.0
      %703 = vmatpush1.msra.mxu0 %v569
      %704 = vmatprep.subr.mxu0 0.0
      %705 = vmatpush1.msra.mxu0 %v570
      %706 = vmatprep.subr.mxu0 0.0
      %707 = vmatpush1.msra.mxu0 %v571
      %708 = vmatprep.subr.mxu0 0.0
      %709 = vmatpush1.msra.mxu0 %v572
      %710 = vmatprep.subr.mxu0 0.0
      %711 = vmatpush1.msra.mxu0 %v573
      %712 = vmatprep.subr.mxu0 0.0
      %713 = vmatpush1.msra.mxu0 %v574
      %714 = vmatprep.subr.mxu0 0.0
      %715 = vmatpush1.msra.mxu0 %v575
      %716 = vmatprep.subr.mxu0 0.0
      %717 = vmatpush1.msra.mxu0 %v576
      %718 = vmatprep.subr.mxu0 0.0
      %719 = vmatpush1.msra.mxu0 %v577
      %720 = vmatprep.subr.mxu0 0.0
      %721 = vmatpush1.msra.mxu0 %v578
      %722 = vmatprep.subr.mxu0 0.0
      %723 = vmatpush1.msra.mxu0 %v579
      %724 = vmatprep.subr.mxu0 0.0
      %725 = vmatpush1.msra.mxu0 %v580
      %726 = vmatprep.subr.mxu0 0.0
      %727 = vmatpush1.msra.mxu0 %v581
      %728 = vmatprep.subr.mxu0 0.0
      %729 = vmatpush1.msra.mxu0 %v582
      %730 = vmatprep.subr.mxu0 0.0
      %731 = vmatpush1.msra.mxu0 %v583
      %732 = vmatprep.subr.mxu0 0.0
      %733 = vmatpush1.msra.mxu0 %v584
      %734 = vmatprep.subr.mxu0 0.0
      %735 = vmatpush1.msra.mxu0 %v585
      %736 = vmatprep.subr.mxu0 0.0
      %737 = vmatpush1.msra.mxu0 %v586
      %738 = vmatprep.subr.mxu0 0.0
      %739 = vmatpush1.msra.mxu0 %v587
      %740 = vmatprep.subr.mxu0 0.0
      %741 = vmatpush1.msra.mxu0 %v588
      %742 = vmatprep.subr.mxu0 0.0
      %743 = vmatpush1.msra.mxu0 %v589
      %744 = vmatprep.subr.mxu0 0.0
      %745 = vmatpush1.msra.mxu0 %v590
      %746 = vmatprep.subr.mxu0 0.0
      %747 = vmatpush1.msra.mxu0 %v591
      %748 = vmatprep.subr.mxu0 0.0
      %749 = vmatpush1.msra.mxu0 %v592
      %750 = vmatprep.subr.mxu0 0.0
      %751 = vmatpush1.msra.mxu0 %v593
      %752 = vmatprep.subr.mxu0 0.0
      %753 = vmatpush1.msra.mxu0 %v594
      %754 = vmatprep.subr.mxu0 0.0
      %755 = vmatpush1.msra.mxu0 %v595
      %756 = vmatprep.mubr.f32.mxu0 %v437
      %757 = vmatmul.mubr.f32.gmra.mrb[0].mxu0 %v435
      %v758 = vpop.f32.mrb[0].mxu0
      %v759 = vadd.f32 0.0, %v758
      %v760 = vpop.f32.mrb[0].mxu0
      %761 = vdwg.mxu0
      %762 = vmatprep.subr.mxu0 0.0
      %763 = vmatpush1.msra.mxu0 %v596
      %764 = vmatprep.subr.mxu0 0.0
      %765 = vmatpush1.msra.mxu0 %v597
      %766 = vmatprep.subr.mxu0 0.0
      %767 = vmatpush1.msra.mxu0 %v598
      %768 = vmatprep.subr.mxu0 0.0
      %769 = vmatpush1.msra.mxu0 %v599
      %770 = vmatprep.subr.mxu0 0.0
      %771 = vmatpush1.msra.mxu0 %v600
      %772 = vmatprep.subr.mxu0 0.0
      %773 = vmatpush1.msra.mxu0 %v601
      %774 = vmatprep.subr.mxu0 0.0
      %775 = vmatpush1.msra.mxu0 %v602
      %776 = vmatprep.subr.mxu0 0.0
      %777 = vmatpush1.msra.mxu0 %v603
      %778 = vmatprep.subr.mxu0 0.0
      %779 = vmatpush1.msra.mxu0 %v604
      %780 = vmatprep.subr.mxu0 0.0
      %781 = vmatpush1.msra.mxu0 %v605
      %782 = vmatprep.subr.mxu0 0.0
      %783 = vmatpush1.msra.mxu0 %v606
      %784 = vmatprep.subr.mxu0 0.0
      %785 = vmatpush1.msra.mxu0 %v607
      %786 = vmatprep.subr.mxu0 0.0
      %787 = vmatpush1.msra.mxu0 %v608
      %788 = vmatprep.subr.mxu0 0.0
      %789 = vmatpush1.msra.mxu0 %v609
      %790 = vmatprep.subr.mxu0 0.0
      %791 = vmatpush1.msra.mxu0 %v610
      %792 = vmatprep.subr.mxu0 0.0
      %793 = vmatpush1.msra.mxu0 %v611
      %794 = vmatprep.subr.mxu0 0.0
      %795 = vmatpush1.msra.mxu0 %v612
      %796 = vmatprep.subr.mxu0 0.0
      %797 = vmatpush1.msra.mxu0 %v613
      %798 = vmatprep.subr.mxu0 0.0
      %799 = vmatpush1.msra.mxu0 %v614
      %800 = vmatprep.subr.mxu0 0.0
      %801 = vmatpush1.msra.mxu0 %v615
      %802 = vmatprep.subr.mxu0 0.0
      %803 = vmatpush1.msra.mxu0 %v616
      %804 = vmatprep.subr.mxu0 0.0
      %805 = vmatpush1.msra.mxu0 %v617
      %806 = vmatprep.subr.mxu0 0.0
      %807 = vmatpush1.msra.mxu0 %v618
      %808 = vmatprep.subr.mxu0 0.0
      %809 = vmatpush1.msra.mxu0 %v619
      %810 = vmatprep.subr.mxu0 0.0
      %811 = vmatpush1.msra.mxu0 %v620
      %812 = vmatprep.subr.mxu0 0.0
      %813 = vmatpush1.msra.mxu0 %v621
      %814 = vmatprep.subr.mxu0 0.0
      %815 = vmatpush1.msra.mxu0 %v622
      %816 = vmatprep.subr.mxu0 0.0
      %817 = vmatpush1.msra.mxu0 %v623
      %818 = vmatprep.subr.mxu0 0.0
      %819 = vmatpush1.msra.mxu0 %v624
      %820 = vmatprep.subr.mxu0 0.0
      %821 = vmatpush1.msra.mxu0 %v625
      %822 = vmatprep.subr.mxu0 0.0
      %823 = vmatpush1.msra.mxu0 %v626
      %824 = vmatprep.subr.mxu0 0.0
      %825 = vmatpush1.msra.mxu0 %v627
      %826 = vmatprep.mubr.f32.mxu0 %v478
      %827 = vmatmul.mubr.f32.gmra.mrb[0].mxu0 %v476
      %v828 = vpop.f32.mrb[0].mxu0
      %v829 = vadd.f32 %v759, %v828
      %v830 = vpop.f32.mrb[0].mxu0
      %831 = vdwg.mxu0
      %832 = vmatprep.subr.mxu0 0.0
      %833 = vmatpush1.msra.mxu0 %v628
      %834 = vmatprep.subr.mxu0 0.0
      %835 = vmatpush1.msra.mxu0 %v629
      %836 = vmatprep.subr.mxu0 0.0
      %837 = vmatpush1.msra.mxu0 %v630
      %838 = vmatprep.subr.mxu0 0.0
      %839 = vmatpush1.msra.mxu0 %v631
      %840 = vmatprep.subr.mxu0 0.0
      %841 = vmatpush1.msra.mxu0 %v632
      %842 = vmatprep.subr.mxu0 0.0
      %843 = vmatpush1.msra.mxu0 %v633
      %844 = vmatprep.subr.mxu0 0.0
      %845 = vmatpush1.msra.mxu0 %v634
      %846 = vmatprep.subr.mxu0 0.0
      %847 = vmatpush1.msra.mxu0 %v635
      %848 = vmatprep.subr.mxu0 0.0
      %849 = vmatpush1.msra.mxu0 %v636
      %850 = vmatprep.subr.mxu0 0.0
      %851 = vmatpush1.msra.mxu0 %v637
      %852 = vmatprep.subr.mxu0 0.0
      %853 = vmatpush1.msra.mxu0 %v638
      %854 = vmatprep.subr.mxu0 0.0
      %855 = vmatpush1.msra.mxu0 %v639
      %856 = vmatprep.subr.mxu0 0.0
      %857 = vmatpush1.msra.mxu0 %v640
      %858 = vmatprep.subr.mxu0 0.0
      %859 = vmatpush1.msra.mxu0 %v641
      %860 = vmatprep.subr.mxu0 0.0
      %861 = vmatpush1.msra.mxu0 %v642
      %862 = vmatprep.subr.mxu0 0.0
      %863 = vmatpush1.msra.mxu0 %v643
      %864 = vmatprep.subr.mxu0 0.0
      %865 = vmatpush1.msra.mxu0 %v644
      %866 = vmatprep.subr.mxu0 0.0
      %867 = vmatpush1.msra.mxu0 %v645
      %868 = vmatprep.subr.mxu0 0.0
      %869 = vmatpush1.msra.mxu0 %v646
      %870 = vmatprep.subr.mxu0 0.0
      %871 = vmatpush1.msra.mxu0 %v647
      %872 = vmatprep.subr.mxu0 0.0
      %873 = vmatpush1.msra.mxu0 %v648
      %874 = vmatprep.subr.mxu0 0.0
      %875 = vmatpush1.msra.mxu0 %v649
      %876 = vmatprep.subr.mxu0 0.0
      %877 = vmatpush1.msra.mxu0 %v650
      %878 = vmatprep.subr.mxu0 0.0
      %879 = vmatpush1.msra.mxu0 %v651
      %880 = vmatprep.subr.mxu0 0.0
      %881 = vmatpush1.msra.mxu0 %v652
      %882 = vmatprep.subr.mxu0 0.0
      %883 = vmatpush1.msra.mxu0 %v653
      %884 = vmatprep.subr.mxu0 0.0
      %885 = vmatpush1.msra.mxu0 %v654
      %886 = vmatprep.subr.mxu0 0.0
      %887 = vmatpush1.msra.mxu0 %v655
      %888 = vmatprep.subr.mxu0 0.0
      %889 = vmatpush1.msra.mxu0 %v656
      %890 = vmatprep.subr.mxu0 0.0
      %891 = vmatpush1.msra.mxu0 %v657
      %892 = vmatprep.subr.mxu0 0.0
      %893 = vmatpush1.msra.mxu0 %v658
      %894 = vmatprep.subr.mxu0 0.0
      %895 = vmatpush1.msra.mxu0 %v659
      %896 = vmatprep.mubr.f32.mxu0 %v519
      %897 = vmatmul.mubr.f32.gmra.mrb[0].mxu0 %v517
      %v898 = vpop.f32.mrb[0].mxu0
      %v899 = vadd.f32 %v829, %v898
      %v900 = vpop.f32.mrb[0].mxu0
      %901 = vdwg.mxu0
      %902 = vmatprep.subr.mxu0 0.0
      %903 = vmatpush1.msra.mxu0 %v660
      %904 = vmatprep.subr.mxu0 0.0
      %905 = vmatpush1.msra.mxu0 %v661
      %906 = vmatprep.subr.mxu0 0.0
      %907 = vmatpush1.msra.mxu0 %v662
      %908 = vmatprep.subr.mxu0 0.0
      %909 = vmatpush1.msra.mxu0 %v663
      %910 = vmatprep.subr.mxu0 0.0
      %911 = vmatpush1.msra.mxu0 %v664
      %912 = vmatprep.subr.mxu0 0.0
      %913 = vmatpush1.msra.mxu0 %v665
      %914 = vmatprep.subr.mxu0 0.0
      %915 = vmatpush1.msra.mxu0 %v666
      %916 = vmatprep.subr.mxu0 0.0
      %917 = vmatpush1.msra.mxu0 %v667
      %918 = vmatprep.subr.mxu0 0.0
      %919 = vmatpush1.msra.mxu0 %v668
      %920 = vmatprep.subr.mxu0 0.0
      %921 = vmatpush1.msra.mxu0 %v669
      %922 = vmatprep.subr.mxu0 0.0
      %923 = vmatpush1.msra.mxu0 %v670
      %924 = vmatprep.subr.mxu0 0.0
      %925 = vmatpush1.msra.mxu0 %v671
      %926 = vmatprep.subr.mxu0 0.0
      %927 = vmatpush1.msra.mxu0 %v672
      %928 = vmatprep.subr.mxu0 0.0
      %929 = vmatpush1.msra.mxu0 %v673
      %930 = vmatprep.subr.mxu0 0.0
      %931 = vmatpush1.msra.mxu0 %v674
      %932 = vmatprep.subr.mxu0 0.0
      %933 = vmatpush1.msra.mxu0 %v675
      %934 = vmatprep.subr.mxu0 0.0
      %935 = vmatpush1.msra.mxu0 %v676
      %936 = vmatprep.subr.mxu0 0.0
      %937 = vmatpush1.msra.mxu0 %v677
      %938 = vmatprep.subr.mxu0 0.0
      %939 = vmatpush1.msra.mxu0 %v678
      %940 = vmatprep.subr.mxu0 0.0
      %941 = vmatpush1.msra.mxu0 %v679
      %942 = vmatprep.subr.mxu0 0.0
      %943 = vmatpush1.msra.mxu0 %v680
      %944 = vmatprep.subr.mxu0 0.0
      %945 = vmatpush1.msra.mxu0 %v681
      %946 = vmatprep.subr.mxu0 0.0
      %947 = vmatpush1.msra.mxu0 %v682
      %948 = vmatprep.subr.mxu0 0.0
      %949 = vmatpush1.msra.mxu0 %v683
      %950 = vmatprep.subr.mxu0 0.0
      %951 = vmatpush1.msra.mxu0 %v684
      %952 = vmatprep.subr.mxu0 0.0
      %953 = vmatpush1.msra.mxu0 %v685
      %954 = vmatprep.subr.mxu0 0.0
      %955 = vmatpush1.msra.mxu0 %v686
      %956 = vmatprep.subr.mxu0 0.0
      %957 = vmatpush1.msra.mxu0 %v687
      %958 = vmatprep.subr.mxu0 0.0
      %959 = vmatpush1.msra.mxu0 %v688
      %960 = vmatprep.subr.mxu0 0.0
      %961 = vmatpush1.msra.mxu0 %v689
      %962 = vmatprep.subr.mxu0 0.0
      %963 = vmatpush1.msra.mxu0 %v690
      %964 = vmatprep.subr.mxu0 0.0
      %965 = vmatpush1.msra.mxu0 %v691
      %966 = vmatprep.mubr.f32.mxu0 %v560
      %967 = vmatmul.mubr.f32.gmra.mrb[0].mxu0 %v558
      %v968 = vpop.f32.mrb[0].mxu0
      %v969 = vadd.f32 %v899, %v968
      %v970 = vpop.f32.mrb[0].mxu0
      %971 = vdwg.mxu0
      %v972 = vld [vmem:[%s3] sm:$0xff]
      %v973 = vld [vmem:[%s3 + $0x8] sm:$0xff]
      %v974 = vld [vmem:[%s3 + $0x10] sm:$0xff]
      %v975 = vld [vmem:[%s3 + $0x18] sm:$0xff]
      %v976 = vld [vmem:[%s3 + $0x20] sm:$0xff]
      %v977 = vld [vmem:[%s3 + $0x28] sm:$0xff]
      %v978 = vld [vmem:[%s3 + $0x30] sm:$0xff]
      %v979 = vld [vmem:[%s3 + $0x38] sm:$0xff]
      %v980 = vld [vmem:[%s3 + $0x40] sm:$0xff]
      %v981 = vld [vmem:[%s3 + $0x48] sm:$0xff]
      %v982 = vld [vmem:[%s3 + $0x50] sm:$0xff]
      %v983 = vld [vmem:[%s3 + $0x58] sm:$0xff]
      %v984 = vld [vmem:[%s3 + $0x60] sm:$0xff]
      %v985 = vld [vmem:[%s3 + $0x68] sm:$0xff]
      %v986 = vld [vmem:[%s3 + $0x70] sm:$0xff]
      %v987 = vld [vmem:[%s3 + $0x78] sm:$0xff]
      %v988 = vld [vmem:[%s3 + $0x80] sm:$0xff]
      %v989 = vld [vmem:[%s3 + $0x88] sm:$0xff]
      %v990 = vld [vmem:[%s3 + $0x90] sm:$0xff]
      %v991 = vld [vmem:[%s3 + $0x98] sm:$0xff]
      %v992 = vld [vmem:[%s3 + $0xa0] sm:$0xff]
      %v993 = vld [vmem:[%s3 + $0xa8] sm:$0xff]
      %v994 = vld [vmem:[%s3 + $0xb0] sm:$0xff]
      %v995 = vld [vmem:[%s3 + $0xb8] sm:$0xff]
      %v996 = vld [vmem:[%s3 + $0xc0] sm:$0xff]
      %v997 = vld [vmem:[%s3 + $0xc8] sm:$0xff]
      %v998 = vld [vmem:[%s3 + $0xd0] sm:$0xff]
      %v999 = vld [vmem:[%s3 + $0xd8] sm:$0xff]
      %v1000 = vld [vmem:[%s3 + $0xe0] sm:$0xff]
      %v1001 = vld [vmem:[%s3 + $0xe8] sm:$0xff]
      %v1002 = vld [vmem:[%s3 + $0xf0] sm:$0xff]
      %v1003 = vld [vmem:[%s3 + $0xf8] sm:$0xff]
      %vm1004 = vcmask 261120
      %v1006 = vsel %vm1004, %v969, 0
      %1008 = vmatprep.subr.mxu0 %v973
      %1009 = vmatpush1.msra.mxu0 %v972
      %1010 = vmatprep.subr.mxu0 %v981
      %1011 = vmatpush1.msra.mxu0 %v980
      %1012 = vmatprep.subr.mxu0 %v989
      %1013 = vmatpush1.msra.mxu0 %v988
      %1014 = vmatprep.subr.mxu0 %v997
      %1015 = vmatpush1.msra.mxu0 %v996
      %1016 = vmatprep.subr.mxu0 0.0
      %1017 = vmatpush1.msra.mxu0 0.0
      %1018 = vmatprep.subr.mxu0 0.0
      %1019 = vmatpush1.msra.mxu0 0.0
      %1020 = vmatprep.subr.mxu0 0.0
      %1021 = vmatpush1.msra.mxu0 0.0
      %1022 = vmatprep.subr.mxu0 0.0
      %1023 = vmatpush1.msra.mxu0 0.0
      %1024 = vmatprep.subr.mxu0 0.0
      %1025 = vmatpush1.msra.mxu0 0.0
      %1026 = vmatprep.subr.mxu0 0.0
      %1027 = vmatpush1.msra.mxu0 0.0
      %1028 = vmatprep.subr.mxu0 0.0
      %1029 = vmatpush1.msra.mxu0 0.0
      %1030 = vmatprep.subr.mxu0 0.0
      %1031 = vmatpush1.msra.mxu0 0.0
      %1032 = vmatprep.subr.mxu0 0.0
      %1033 = vmatpush1.msra.mxu0 0.0
      %1034 = vmatprep.subr.mxu0 0.0
      %1035 = vmatpush1.msra.mxu0 0.0
      %1036 = vmatprep.subr.mxu0 0.0
      %1037 = vmatpush1.msra.mxu0 0.0
      %1038 = vmatprep.subr.mxu0 0.0
      %1039 = vmatpush1.msra.mxu0 0.0
      %1040 = vmatprep.subr.mxu0 0.0
      %1041 = vmatpush1.msra.mxu0 0.0
      %1042 = vmatprep.subr.mxu0 0.0
      %1043 = vmatpush1.msra.mxu0 0.0
      %1044 = vmatprep.subr.mxu0 0.0
      %1045 = vmatpush1.msra.mxu0 0.0
      %1046 = vmatprep.subr.mxu0 0.0
      %1047 = vmatpush1.msra.mxu0 0.0
      %1048 = vmatprep.subr.mxu0 0.0
      %1049 = vmatpush1.msra.mxu0 0.0
      %1050 = vmatprep.subr.mxu0 0.0
      %1051 = vmatpush1.msra.mxu0 0.0
      %1052 = vmatprep.subr.mxu0 0.0
      %1053 = vmatpush1.msra.mxu0 0.0
      %1054 = vmatprep.subr.mxu0 0.0
      %1055 = vmatpush1.msra.mxu0 0.0
      %1056 = vmatprep.subr.mxu0 0.0
      %1057 = vmatpush1.msra.mxu0 0.0
      %1058 = vmatprep.subr.mxu0 0.0
      %1059 = vmatpush1.msra.mxu0 0.0
      %1060 = vmatprep.subr.mxu0 0.0
      %1061 = vmatpush1.msra.mxu0 0.0
      %1062 = vmatprep.subr.mxu0 0.0
      %1063 = vmatpush1.msra.mxu0 0.0
      %1064 = vmatprep.subr.mxu0 0.0
      %1065 = vmatpush1.msra.mxu0 0.0
      %1066 = vmatprep.subr.mxu0 0.0
      %1067 = vmatpush1.msra.mxu0 0.0
      %1068 = vmatprep.subr.mxu0 0.0
      %1069 = vmatpush1.msra.mxu0 0.0
      %1070 = vmatprep.subr.mxu0 0.0
      %1071 = vmatpush1.msra.mxu0 0.0
      %1072 = vmatprep.mubr.f32.mxu0 0.0
      %1073 = vmatmul.mubr.f32.gmra.mrb[0].mxu0 %v1006
      %v1074 = vpop.f32.mrb[0].mxu0
      %v1075 = vadd.f32 0.0, %v1074
      %v1076 = vpop.f32.mrb[0].mxu0
      %v1077 = vadd.f32 0.0, %v1076
      %1078 = vdwg.mxu0
      %1079 = vmatprep.subr.mxu0 %v975
      %1080 = vmatpush1.msra.mxu0 %v974
      %1081 = vmatprep.subr.mxu0 %v983
      %1082 = vmatpush1.msra.mxu0 %v982
      %1083 = vmatprep.subr.mxu0 %v991
      %1084 = vmatpush1.msra.mxu0 %v990
      %1085 = vmatprep.subr.mxu0 %v999
      %1086 = vmatpush1.msra.mxu0 %v998
      %1087 = vmatprep.subr.mxu0 0.0
      %1088 = vmatpush1.msra.mxu0 0.0
      %1089 = vmatprep.subr.mxu0 0.0
      %1090 = vmatpush1.msra.mxu0 0.0
      %1091 = vmatprep.subr.mxu0 0.0
      %1092 = vmatpush1.msra.mxu0 0.0
      %1093 = vmatprep.subr.mxu0 0.0
      %1094 = vmatpush1.msra.mxu0 0.0
      %1095 = vmatprep.subr.mxu0 0.0
      %1096 = vmatpush1.msra.mxu0 0.0
      %1097 = vmatprep.subr.mxu0 0.0
      %1098 = vmatpush1.msra.mxu0 0.0
      %1099 = vmatprep.subr.mxu0 0.0
      %1100 = vmatpush1.msra.mxu0 0.0
      %1101 = vmatprep.subr.mxu0 0.0
      %1102 = vmatpush1.msra.mxu0 0.0
      %1103 = vmatprep.subr.mxu0 0.0
      %1104 = vmatpush1.msra.mxu0 0.0
      %1105 = vmatprep.subr.mxu0 0.0
      %1106 = vmatpush1.msra.mxu0 0.0
      %1107 = vmatprep.subr.mxu0 0.0
      %1108 = vmatpush1.msra.mxu0 0.0
      %1109 = vmatprep.subr.mxu0 0.0
      %1110 = vmatpush1.msra.mxu0 0.0
      %1111 = vmatprep.subr.mxu0 0.0
      %1112 = vmatpush1.msra.mxu0 0.0
      %1113 = vmatprep.subr.mxu0 0.0
      %1114 = vmatpush1.msra.mxu0 0.0
      %1115 = vmatprep.subr.mxu0 0.0
      %1116 = vmatpush1.msra.mxu0 0.0
      %1117 = vmatprep.subr.mxu0 0.0
      %1118 = vmatpush1.msra.mxu0 0.0
      %1119 = vmatprep.subr.mxu0 0.0
      %1120 = vmatpush1.msra.mxu0 0.0
      %1121 = vmatprep.subr.mxu0 0.0
      %1122 = vmatpush1.msra.mxu0 0.0
      %1123 = vmatprep.subr.mxu0 0.0
      %1124 = vmatpush1.msra.mxu0 0.0
      %1125 = vmatprep.subr.mxu0 0.0
      %1126 = vmatpush1.msra.mxu0 0.0
      %1127 = vmatprep.subr.mxu0 0.0
      %1128 = vmatpush1.msra.mxu0 0.0
      %1129 = vmatprep.subr.mxu0 0.0
      %1130 = vmatpush1.msra.mxu0 0.0
      %1131 = vmatprep.subr.mxu0 0.0
      %1132 = vmatpush1.msra.mxu0 0.0
      %1133 = vmatprep.subr.mxu0 0.0
      %1134 = vmatpush1.msra.mxu0 0.0
      %1135 = vmatprep.subr.mxu0 0.0
      %1136 = vmatpush1.msra.mxu0 0.0
      %1137 = vmatprep.subr.mxu0 0.0
      %1138 = vmatpush1.msra.mxu0 0.0
      %1139 = vmatprep.subr.mxu0 0.0
      %1140 = vmatpush1.msra.mxu0 0.0
      %1141 = vmatprep.subr.mxu0 0.0
      %1142 = vmatpush1.msra.mxu0 0.0
      %1143 = vmatprep.mubr.f32.mxu0 0.0
      %1144 = vmatmul.mubr.f32.gmra.mrb[0].mxu0 %v1006
      %v1145 = vpop.f32.mrb[0].mxu0
      %v1146 = vadd.f32 0.0, %v1145
      %v1147 = vpop.f32.mrb[0].mxu0
      %v1148 = vadd.f32 0.0, %v1147
      %1149 = vdwg.mxu0
      %1150 = vmatprep.subr.mxu0 %v977
      %1151 = vmatpush1.msra.mxu0 %v976
      %1152 = vmatprep.subr.mxu0 %v985
      %1153 = vmatpush1.msra.mxu0 %v984
      %1154 = vmatprep.subr.mxu0 %v993
      %1155 = vmatpush1.msra.mxu0 %v992
      %1156 = vmatprep.subr.mxu0 %v1001
      %1157 = vmatpush1.msra.mxu0 %v1000
      %1158 = vmatprep.subr.mxu0 0.0
      %1159 = vmatpush1.msra.mxu0 0.0
      %1160 = vmatprep.subr.mxu0 0.0
      %1161 = vmatpush1.msra.mxu0 0.0
      %1162 = vmatprep.subr.mxu0 0.0
      %1163 = vmatpush1.msra.mxu0 0.0
      %1164 = vmatprep.subr.mxu0 0.0
      %1165 = vmatpush1.msra.mxu0 0.0
      %1166 = vmatprep.subr.mxu0 0.0
      %1167 = vmatpush1.msra.mxu0 0.0
      %1168 = vmatprep.subr.mxu0 0.0
      %1169 = vmatpush1.msra.mxu0 0.0
      %1170 = vmatprep.subr.mxu0 0.0
      %1171 = vmatpush1.msra.mxu0 0.0
      %1172 = vmatprep.subr.mxu0 0.0
      %1173 = vmatpush1.msra.mxu0 0.0
      %1174 = vmatprep.subr.mxu0 0.0
      %1175 = vmatpush1.msra.mxu0 0.0
      %1176 = vmatprep.subr.mxu0 0.0
      %1177 = vmatpush1.msra.mxu0 0.0
      %1178 = vmatprep.subr.mxu0 0.0
      %1179 = vmatpush1.msra.mxu0 0.0
      %1180 = vmatprep.subr.mxu0 0.0
      %1181 = vmatpush1.msra.mxu0 0.0
      %1182 = vmatprep.subr.mxu0 0.0
      %1183 = vmatpush1.msra.mxu0 0.0
      %1184 = vmatprep.subr.mxu0 0.0
      %1185 = vmatpush1.msra.mxu0 0.0
      %1186 = vmatprep.subr.mxu0 0.0
      %1187 = vmatpush1.msra.mxu0 0.0
      %1188 = vmatprep.subr.mxu0 0.0
      %1189 = vmatpush1.msra.mxu0 0.0
      %1190 = vmatprep.subr.mxu0 0.0
      %1191 = vmatpush1.msra.mxu0 0.0
      %1192 = vmatprep.subr.mxu0 0.0
      %1193 = vmatpush1.msra.mxu0 0.0
      %1194 = vmatprep.subr.mxu0 0.0
      %1195 = vmatpush1.msra.mxu0 0.0
      %1196 = vmatprep.subr.mxu0 0.0
      %1197 = vmatpush1.msra.mxu0 0.0
      %1198 = vmatprep.subr.mxu0 0.0
      %1199 = vmatpush1.msra.mxu0 0.0
      %1200 = vmatprep.subr.mxu0 0.0
      %1201 = vmatpush1.msra.mxu0 0.0
      %1202 = vmatprep.subr.mxu0 0.0
      %1203 = vmatpush1.msra.mxu0 0.0
      %1204 = vmatprep.subr.mxu0 0.0
      %1205 = vmatpush1.msra.mxu0 0.0
      %1206 = vmatprep.subr.mxu0 0.0
      %1207 = vmatpush1.msra.mxu0 0.0
      %1208 = vmatprep.subr.mxu0 0.0
      %1209 = vmatpush1.msra.mxu0 0.0
      %1210 = vmatprep.subr.mxu0 0.0
      %1211 = vmatpush1.msra.mxu0 0.0
      %1212 = vmatprep.subr.mxu0 0.0
      %1213 = vmatpush1.msra.mxu0 0.0
      %1214 = vmatprep.mubr.f32.mxu0 0.0
      %1215 = vmatmul.mubr.f32.gmra.mrb[0].mxu0 %v1006
      %v1216 = vpop.f32.mrb[0].mxu0
      %v1217 = vadd.f32 0.0, %v1216
      %v1218 = vpop.f32.mrb[0].mxu0
      %v1219 = vadd.f32 0.0, %v1218
      %1220 = vdwg.mxu0
      %1221 = vmatprep.subr.mxu0 %v979
      %1222 = vmatpush1.msra.mxu0 %v978
      %1223 = vmatprep.subr.mxu0 %v987
      %1224 = vmatpush1.msra.mxu0 %v986
      %1225 = vmatprep.subr.mxu0 %v995
      %1226 = vmatpush1.msra.mxu0 %v994
      %1227 = vmatprep.subr.mxu0 %v1003
      %1228 = vmatpush1.msra.mxu0 %v1002
      %1229 = vmatprep.subr.mxu0 0.0
      %1230 = vmatpush1.msra.mxu0 0.0
      %1231 = vmatprep.subr.mxu0 0.0
      %1232 = vmatpush1.msra.mxu0 0.0
      %1233 = vmatprep.subr.mxu0 0.0
      %1234 = vmatpush1.msra.mxu0 0.0
      %1235 = vmatprep.subr.mxu0 0.0
      %1236 = vmatpush1.msra.mxu0 0.0
      %1237 = vmatprep.subr.mxu0 0.0
      %1238 = vmatpush1.msra.mxu0 0.0
      %1239 = vmatprep.subr.mxu0 0.0
      %1240 = vmatpush1.msra.mxu0 0.0
      %1241 = vmatprep.subr.mxu0 0.0
      %1242 = vmatpush1.msra.mxu0 0.0
      %1243 = vmatprep.subr.mxu0 0.0
      %1244 = vmatpush1.msra.mxu0 0.0
      %1245 = vmatprep.subr.mxu0 0.0
      %1246 = vmatpush1.msra.mxu0 0.0
      %1247 = vmatprep.subr.mxu0 0.0
      %1248 = vmatpush1.msra.mxu0 0.0
      %1249 = vmatprep.subr.mxu0 0.0
      %1250 = vmatpush1.msra.mxu0 0.0
      %1251 = vmatprep.subr.mxu0 0.0
      %1252 = vmatpush1.msra.mxu0 0.0
      %1253 = vmatprep.subr.mxu0 0.0
      %1254 = vmatpush1.msra.mxu0 0.0
      %1255 = vmatprep.subr.mxu0 0.0
      %1256 = vmatpush1.msra.mxu0 0.0
      %1257 = vmatprep.subr.mxu0 0.0
      %1258 = vmatpush1.msra.mxu0 0.0
      %1259 = vmatprep.subr.mxu0 0.0
      %1260 = vmatpush1.msra.mxu0 0.0
      %1261 = vmatprep.subr.mxu0 0.0
      %1262 = vmatpush1.msra.mxu0 0.0
      %1263 = vmatprep.subr.mxu0 0.0
      %1264 = vmatpush1.msra.mxu0 0.0
      %1265 = vmatprep.subr.mxu0 0.0
      %1266 = vmatpush1.msra.mxu0 0.0
      %1267 = vmatprep.subr.mxu0 0.0
      %1268 = vmatpush1.msra.mxu0 0.0
      %1269 = vmatprep.subr.mxu0 0.0
      %1270 = vmatpush1.msra.mxu0 0.0
      %1271 = vmatprep.subr.mxu0 0.0
      %1272 = vmatpush1.msra.mxu0 0.0
      %1273 = vmatprep.subr.mxu0 0.0
      %1274 = vmatpush1.msra.mxu0 0.0
      %1275 = vmatprep.subr.mxu0 0.0
      %1276 = vmatpush1.msra.mxu0 0.0
      %1277 = vmatprep.subr.mxu0 0.0
      %1278 = vmatpush1.msra.mxu0 0.0
      %1279 = vmatprep.subr.mxu0 0.0
      %1280 = vmatpush1.msra.mxu0 0.0
      %1281 = vmatprep.subr.mxu0 0.0
      %1282 = vmatpush1.msra.mxu0 0.0
      %1283 = vmatprep.subr.mxu0 0.0
      %1284 = vmatpush1.msra.mxu0 0.0
      %1285 = vmatprep.mubr.f32.mxu0 0.0
      %1286 = vmatmul.mubr.f32.gmra.mrb[0].mxu0 %v1006
      %v1287 = vpop.f32.mrb[0].mxu0
      %v1288 = vadd.f32 0.0, %v1287
      %v1289 = vpop.f32.mrb[0].mxu0
      %v1290 = vadd.f32 0.0, %v1289
      %1291 = vdwg.mxu0
      %v1292 = vsub.f32 %v435, %v1075
      %v1293 = vsub.f32 %v437, %v1077
      %v1294 = vsub.f32 %v476, %v1146
      %v1295 = vsub.f32 %v478, %v1148
      %v1296 = vsub.f32 %v517, %v1217
      %v1297 = vsub.f32 %v519, %v1219
      %v1298 = vsub.f32 %v558, %v1288
      %v1299 = vsub.f32 %v560, %v1290
      %v1300 = vmul.f32 %v1292, %v1292
      %v1301 = vmul.f32 %v1293, %v1293
      %v1302 = vmul.f32 %v1294, %v1294
      %v1303 = vmul.f32 %v1295, %v1295
      %v1304 = vmul.f32 %v1296, %v1296
      %v1305 = vmul.f32 %v1297, %v1297
      %v1306 = vmul.f32 %v1298, %v1298
      %v1307 = vmul.f32 %v1299, %v1299
      %1308 = vmatprep.subr.mxu0 0.0
      %1309 = vmatpush1.msra.mxu0 %v564
      %1310 = vmatprep.subr.mxu0 0.0
      %1311 = vmatpush1.msra.mxu0 %v565
      %1312 = vmatprep.subr.mxu0 0.0
      %1313 = vmatpush1.msra.mxu0 %v566
      %1314 = vmatprep.subr.mxu0 0.0
      %1315 = vmatpush1.msra.mxu0 %v567
      %1316 = vmatprep.subr.mxu0 0.0
      %1317 = vmatpush1.msra.mxu0 %v568
      %1318 = vmatprep.subr.mxu0 0.0
      %1319 = vmatpush1.msra.mxu0 %v569
      %1320 = vmatprep.subr.mxu0 0.0
      %1321 = vmatpush1.msra.mxu0 %v570
      %1322 = vmatprep.subr.mxu0 0.0
      %1323 = vmatpush1.msra.mxu0 %v571
      %1324 = vmatprep.subr.mxu0 0.0
      %1325 = vmatpush1.msra.mxu0 %v572
      %1326 = vmatprep.subr.mxu0 0.0
      %1327 = vmatpush1.msra.mxu0 %v573
      %1328 = vmatprep.subr.mxu0 0.0
      %1329 = vmatpush1.msra.mxu0 %v574
      %1330 = vmatprep.subr.mxu0 0.0
      %1331 = vmatpush1.msra.mxu0 %v575
      %1332 = vmatprep.subr.mxu0 0.0
      %1333 = vmatpush1.msra.mxu0 %v576
      %1334 = vmatprep.subr.mxu0 0.0
      %1335 = vmatpush1.msra.mxu0 %v577
      %1336 = vmatprep.subr.mxu0 0.0
      %1337 = vmatpush1.msra.mxu0 %v578
      %1338 = vmatprep.subr.mxu0 0.0
      %1339 = vmatpush1.msra.mxu0 %v579
      %1340 = vmatprep.subr.mxu0 0.0
      %1341 = vmatpush1.msra.mxu0 %v580
      %1342 = vmatprep.subr.mxu0 0.0
      %1343 = vmatpush1.msra.mxu0 %v581
      %1344 = vmatprep.subr.mxu0 0.0
      %1345 = vmatpush1.msra.mxu0 %v582
      %1346 = vmatprep.subr.mxu0 0.0
      %1347 = vmatpush1.msra.mxu0 %v583
      %1348 = vmatprep.subr.mxu0 0.0
      %1349 = vmatpush1.msra.mxu0 %v584
      %1350 = vmatprep.subr.mxu0 0.0
      %1351 = vmatpush1.msra.mxu0 %v585
      %1352 = vmatprep.subr.mxu0 0.0
      %1353 = vmatpush1.msra.mxu0 %v586
      %1354 = vmatprep.subr.mxu0 0.0
      %1355 = vmatpush1.msra.mxu0 %v587
      %1356 = vmatprep.subr.mxu0 0.0
      %1357 = vmatpush1.msra.mxu0 %v588
      %1358 = vmatprep.subr.mxu0 0.0
      %1359 = vmatpush1.msra.mxu0 %v589
      %1360 = vmatprep.subr.mxu0 0.0
      %1361 = vmatpush1.msra.mxu0 %v590
      %1362 = vmatprep.subr.mxu0 0.0
      %1363 = vmatpush1.msra.mxu0 %v591
      %1364 = vmatprep.subr.mxu0 0.0
      %1365 = vmatpush1.msra.mxu0 %v592
      %1366 = vmatprep.subr.mxu0 0.0
      %1367 = vmatpush1.msra.mxu0 %v593
      %1368 = vmatprep.subr.mxu0 0.0
      %1369 = vmatpush1.msra.mxu0 %v594
      %1370 = vmatprep.subr.mxu0 0.0
      %1371 = vmatpush1.msra.mxu0 %v595
      %1372 = vmatprep.mubr.f32.mxu0 %v1301
      %1373 = vmatmul.mubr.f32.gmra.mrb[0].mxu0 %v1300
      %v1374 = vpop.f32.mrb[0].mxu0
      %v1375 = vadd.f32 0.0, %v1374
      %v1376 = vpop.f32.mrb[0].mxu0
      %1377 = vdwg.mxu0
      %1378 = vmatprep.subr.mxu0 0.0
      %1379 = vmatpush1.msra.mxu0 %v596
      %1380 = vmatprep.subr.mxu0 0.0
      %1381 = vmatpush1.msra.mxu0 %v597
      %1382 = vmatprep.subr.mxu0 0.0
      %1383 = vmatpush1.msra.mxu0 %v598
      %1384 = vmatprep.subr.mxu0 0.0
      %1385 = vmatpush1.msra.mxu0 %v599
      %1386 = vmatprep.subr.mxu0 0.0
      %1387 = vmatpush1.msra.mxu0 %v600
      %1388 = vmatprep.subr.mxu0 0.0
      %1389 = vmatpush1.msra.mxu0 %v601
      %1390 = vmatprep.subr.mxu0 0.0
      %1391 = vmatpush1.msra.mxu0 %v602
      %1392 = vmatprep.subr.mxu0 0.0
      %1393 = vmatpush1.msra.mxu0 %v603
      %1394 = vmatprep.subr.mxu0 0.0
      %1395 = vmatpush1.msra.mxu0 %v604
      %1396 = vmatprep.subr.mxu0 0.0
      %1397 = vmatpush1.msra.mxu0 %v605
      %1398 = vmatprep.subr.mxu0 0.0
      %1399 = vmatpush1.msra.mxu0 %v606
      %1400 = vmatprep.subr.mxu0 0.0
      %1401 = vmatpush1.msra.mxu0 %v607
      %1402 = vmatprep.subr.mxu0 0.0
      %1403 = vmatpush1.msra.mxu0 %v608
      %1404 = vmatprep.subr.mxu0 0.0
      %1405 = vmatpush1.msra.mxu0 %v609
      %1406 = vmatprep.subr.mxu0 0.0
      %1407 = vmatpush1.msra.mxu0 %v610
      %1408 = vmatprep.subr.mxu0 0.0
      %1409 = vmatpush1.msra.mxu0 %v611
      %1410 = vmatprep.subr.mxu0 0.0
      %1411 = vmatpush1.msra.mxu0 %v612
      %1412 = vmatprep.subr.mxu0 0.0
      %1413 = vmatpush1.msra.mxu0 %v613
      %1414 = vmatprep.subr.mxu0 0.0
      %1415 = vmatpush1.msra.mxu0 %v614
      %1416 = vmatprep.subr.mxu0 0.0
      %1417 = vmatpush1.msra.mxu0 %v615
      %1418 = vmatprep.subr.mxu0 0.0
      %1419 = vmatpush1.msra.mxu0 %v616
      %1420 = vmatprep.subr.mxu0 0.0
      %1421 = vmatpush1.msra.mxu0 %v617
      %1422 = vmatprep.subr.mxu0 0.0
      %1423 = vmatpush1.msra.mxu0 %v618
      %1424 = vmatprep.subr.mxu0 0.0
      %1425 = vmatpush1.msra.mxu0 %v619
      %1426 = vmatprep.subr.mxu0 0.0
      %1427 = vmatpush1.msra.mxu0 %v620
      %1428 = vmatprep.subr.mxu0 0.0
      %1429 = vmatpush1.msra.mxu0 %v621
      %1430 = vmatprep.subr.mxu0 0.0
      %1431 = vmatpush1.msra.mxu0 %v622
      %1432 = vmatprep.subr.mxu0 0.0
      %1433 = vmatpush1.msra.mxu0 %v623
      %1434 = vmatprep.subr.mxu0 0.0
      %1435 = vmatpush1.msra.mxu0 %v624
      %1436 = vmatprep.subr.mxu0 0.0
      %1437 = vmatpush1.msra.mxu0 %v625
      %1438 = vmatprep.subr.mxu0 0.0
      %1439 = vmatpush1.msra.mxu0 %v626
      %1440 = vmatprep.subr.mxu0 0.0
      %1441 = vmatpush1.msra.mxu0 %v627
      %1442 = vmatprep.mubr.f32.mxu0 %v1303
      %1443 = vmatmul.mubr.f32.gmra.mrb[0].mxu0 %v1302
      %v1444 = vpop.f32.mrb[0].mxu0
      %v1445 = vadd.f32 %v1375, %v1444
      %v1446 = vpop.f32.mrb[0].mxu0
      %1447 = vdwg.mxu0
      %1448 = vmatprep.subr.mxu0 0.0
      %1449 = vmatpush1.msra.mxu0 %v628
      %1450 = vmatprep.subr.mxu0 0.0
      %1451 = vmatpush1.msra.mxu0 %v629
      %1452 = vmatprep.subr.mxu0 0.0
      %1453 = vmatpush1.msra.mxu0 %v630
      %1454 = vmatprep.subr.mxu0 0.0
      %1455 = vmatpush1.msra.mxu0 %v631
      %1456 = vmatprep.subr.mxu0 0.0
      %1457 = vmatpush1.msra.mxu0 %v632
      %1458 = vmatprep.subr.mxu0 0.0
      %1459 = vmatpush1.msra.mxu0 %v633
      %1460 = vmatprep.subr.mxu0 0.0
      %1461 = vmatpush1.msra.mxu0 %v634
      %1462 = vmatprep.subr.mxu0 0.0
      %1463 = vmatpush1.msra.mxu0 %v635
      %1464 = vmatprep.subr.mxu0 0.0
      %1465 = vmatpush1.msra.mxu0 %v636
      %1466 = vmatprep.subr.mxu0 0.0
      %1467 = vmatpush1.msra.mxu0 %v637
      %1468 = vmatprep.subr.mxu0 0.0
      %1469 = vmatpush1.msra.mxu0 %v638
      %1470 = vmatprep.subr.mxu0 0.0
      %1471 = vmatpush1.msra.mxu0 %v639
      %1472 = vmatprep.subr.mxu0 0.0
      %1473 = vmatpush1.msra.mxu0 %v640
      %1474 = vmatprep.subr.mxu0 0.0
      %1475 = vmatpush1.msra.mxu0 %v641
      %1476 = vmatprep.subr.mxu0 0.0
      %1477 = vmatpush1.msra.mxu0 %v642
      %1478 = vmatprep.subr.mxu0 0.0
      %1479 = vmatpush1.msra.mxu0 %v643
      %1480 = vmatprep.subr.mxu0 0.0
      %1481 = vmatpush1.msra.mxu0 %v644
      %1482 = vmatprep.subr.mxu0 0.0
      %1483 = vmatpush1.msra.mxu0 %v645
      %1484 = vmatprep.subr.mxu0 0.0
      %1485 = vmatpush1.msra.mxu0 %v646
      %1486 = vmatprep.subr.mxu0 0.0
      %1487 = vmatpush1.msra.mxu0 %v647
      %1488 = vmatprep.subr.mxu0 0.0
      %1489 = vmatpush1.msra.mxu0 %v648
      %1490 = vmatprep.subr.mxu0 0.0
      %1491 = vmatpush1.msra.mxu0 %v649
      %1492 = vmatprep.subr.mxu0 0.0
      %1493 = vmatpush1.msra.mxu0 %v650
      %1494 = vmatprep.subr.mxu0 0.0
      %1495 = vmatpush1.msra.mxu0 %v651
      %1496 = vmatprep.subr.mxu0 0.0
      %1497 = vmatpush1.msra.mxu0 %v652
      %1498 = vmatprep.subr.mxu0 0.0
      %1499 = vmatpush1.msra.mxu0 %v653
      %1500 = vmatprep.subr.mxu0 0.0
      %1501 = vmatpush1.msra.mxu0 %v654
      %1502 = vmatprep.subr.mxu0 0.0
      %1503 = vmatpush1.msra.mxu0 %v655
      %1504 = vmatprep.subr.mxu0 0.0
      %1505 = vmatpush1.msra.mxu0 %v656
      %1506 = vmatprep.subr.mxu0 0.0
      %1507 = vmatpush1.msra.mxu0 %v657
      %1508 = vmatprep.subr.mxu0 0.0
      %1509 = vmatpush1.msra.mxu0 %v658
      %1510 = vmatprep.subr.mxu0 0.0
      %1511 = vmatpush1.msra.mxu0 %v659
      %1512 = vmatprep.mubr.f32.mxu0 %v1305
      %1513 = vmatmul.mubr.f32.gmra.mrb[0].mxu0 %v1304
      %v1514 = vpop.f32.mrb[0].mxu0
      %v1515 = vadd.f32 %v1445, %v1514
      %v1516 = vpop.f32.mrb[0].mxu0
      %1517 = vdwg.mxu0
      %1518 = vmatprep.subr.mxu0 0.0
      %1519 = vmatpush1.msra.mxu0 %v660
      %1520 = vmatprep.subr.mxu0 0.0
      %1521 = vmatpush1.msra.mxu0 %v661
      %1522 = vmatprep.subr.mxu0 0.0
      %1523 = vmatpush1.msra.mxu0 %v662
      %1524 = vmatprep.subr.mxu0 0.0
      %1525 = vmatpush1.msra.mxu0 %v663
      %1526 = vmatprep.subr.mxu0 0.0
      %1527 = vmatpush1.msra.mxu0 %v664
      %1528 = vmatprep.subr.mxu0 0.0
      %1529 = vmatpush1.msra.mxu0 %v665
      %1530 = vmatprep.subr.mxu0 0.0
      %1531 = vmatpush1.msra.mxu0 %v666
      %1532 = vmatprep.subr.mxu0 0.0
      %1533 = vmatpush1.msra.mxu0 %v667
      %1534 = vmatprep.subr.mxu0 0.0
      %1535 = vmatpush1.msra.mxu0 %v668
      %1536 = vmatprep.subr.mxu0 0.0
      %1537 = vmatpush1.msra.mxu0 %v669
      %1538 = vmatprep.subr.mxu0 0.0
      %1539 = vmatpush1.msra.mxu0 %v670
      %1540 = vmatprep.subr.mxu0 0.0
      %1541 = vmatpush1.msra.mxu0 %v671
      %1542 = vmatprep.subr.mxu0 0.0
      %1543 = vmatpush1.msra.mxu0 %v672
      %1544 = vmatprep.subr.mxu0 0.0
      %1545 = vmatpush1.msra.mxu0 %v673
      %1546 = vmatprep.subr.mxu0 0.0
      %1547 = vmatpush1.msra.mxu0 %v674
      %1548 = vmatprep.subr.mxu0 0.0
      %1549 = vmatpush1.msra.mxu0 %v675
      %1550 = vmatprep.subr.mxu0 0.0
      %1551 = vmatpush1.msra.mxu0 %v676
      %1552 = vmatprep.subr.mxu0 0.0
      %1553 = vmatpush1.msra.mxu0 %v677
      %1554 = vmatprep.subr.mxu0 0.0
      %1555 = vmatpush1.msra.mxu0 %v678
      %1556 = vmatprep.subr.mxu0 0.0
      %1557 = vmatpush1.msra.mxu0 %v679
      %1558 = vmatprep.subr.mxu0 0.0
      %1559 = vmatpush1.msra.mxu0 %v680
      %1560 = vmatprep.subr.mxu0 0.0
      %1561 = vmatpush1.msra.mxu0 %v681
      %1562 = vmatprep.subr.mxu0 0.0
      %1563 = vmatpush1.msra.mxu0 %v682
      %1564 = vmatprep.subr.mxu0 0.0
      %1565 = vmatpush1.msra.mxu0 %v683
      %1566 = vmatprep.subr.mxu0 0.0
      %1567 = vmatpush1.msra.mxu0 %v684
      %1568 = vmatprep.subr.mxu0 0.0
      %1569 = vmatpush1.msra.mxu0 %v685
      %1570 = vmatprep.subr.mxu0 0.0
      %1571 = vmatpush1.msra.mxu0 %v686
      %1572 = vmatprep.subr.mxu0 0.0
      %1573 = vmatpush1.msra.mxu0 %v687
      %1574 = vmatprep.subr.mxu0 0.0
      %1575 = vmatpush1.msra.mxu0 %v688
      %1576 = vmatprep.subr.mxu0 0.0
      %1577 = vmatpush1.msra.mxu0 %v689
      %1578 = vmatprep.subr.mxu0 0.0
      %1579 = vmatpush1.msra.mxu0 %v690
      %1580 = vmatprep.subr.mxu0 0.0
      %1581 = vmatpush1.msra.mxu0 %v691
      %1582 = vmatprep.mubr.f32.mxu0 %v1307
      %1583 = vmatmul.mubr.f32.gmra.mrb[0].mxu0 %v1306
      %v1584 = vpop.f32.mrb[0].mxu0
      %v1585 = vadd.f32 %v1515, %v1584
      %v1586 = vpop.f32.mrb[0].mxu0
      %1587 = vdwg.mxu0
      %v1589 = vsel %vm1004, %v1585, 0
      %1591 = vmatprep.subr.mxu0 %v973
      %1592 = vmatpush1.msra.mxu0 %v972
      %1593 = vmatprep.subr.mxu0 %v981
      %1594 = vmatpush1.msra.mxu0 %v980
      %1595 = vmatprep.subr.mxu0 %v989
      %1596 = vmatpush1.msra.mxu0 %v988
      %1597 = vmatprep.subr.mxu0 %v997
      %1598 = vmatpush1.msra.mxu0 %v996
      %1599 = vmatprep.subr.mxu0 0.0
      %1600 = vmatpush1.msra.mxu0 0.0
      %1601 = vmatprep.subr.mxu0 0.0
      %1602 = vmatpush1.msra.mxu0 0.0
      %1603 = vmatprep.subr.mxu0 0.0
      %1604 = vmatpush1.msra.mxu0 0.0
      %1605 = vmatprep.subr.mxu0 0.0
      %1606 = vmatpush1.msra.mxu0 0.0
      %1607 = vmatprep.subr.mxu0 0.0
      %1608 = vmatpush1.msra.mxu0 0.0
      %1609 = vmatprep.subr.mxu0 0.0
      %1610 = vmatpush1.msra.mxu0 0.0
      %1611 = vmatprep.subr.mxu0 0.0
      %1612 = vmatpush1.msra.mxu0 0.0
      %1613 = vmatprep.subr.mxu0 0.0
      %1614 = vmatpush1.msra.mxu0 0.0
      %1615 = vmatprep.subr.mxu0 0.0
      %1616 = vmatpush1.msra.mxu0 0.0
      %1617 = vmatprep.subr.mxu0 0.0
      %1618 = vmatpush1.msra.mxu0 0.0
      %1619 = vmatprep.subr.mxu0 0.0
      %1620 = vmatpush1.msra.mxu0 0.0
      %1621 = vmatprep.subr.mxu0 0.0
      %1622 = vmatpush1.msra.mxu0 0.0
      %1623 = vmatprep.subr.mxu0 0.0
      %1624 = vmatpush1.msra.mxu0 0.0
      %1625 = vmatprep.subr.mxu0 0.0
      %1626 = vmatpush1.msra.mxu0 0.0
      %1627 = vmatprep.subr.mxu0 0.0
      %1628 = vmatpush1.msra.mxu0 0.0
      %1629 = vmatprep.subr.mxu0 0.0
      %1630 = vmatpush1.msra.mxu0 0.0
      %1631 = vmatprep.subr.mxu0 0.0
      %1632 = vmatpush1.msra.mxu0 0.0
      %1633 = vmatprep.subr.mxu0 0.0
      %1634 = vmatpush1.msra.mxu0 0.0
      %1635 = vmatprep.subr.mxu0 0.0
      %1636 = vmatpush1.msra.mxu0 0.0
      %1637 = vmatprep.subr.mxu0 0.0
      %1638 = vmatpush1.msra.mxu0 0.0
      %1639 = vmatprep.subr.mxu0 0.0
      %1640 = vmatpush1.msra.mxu0 0.0
      %1641 = vmatprep.subr.mxu0 0.0
      %1642 = vmatpush1.msra.mxu0 0.0
      %1643 = vmatprep.subr.mxu0 0.0
      %1644 = vmatpush1.msra.mxu0 0.0
      %1645 = vmatprep.subr.mxu0 0.0
      %1646 = vmatpush1.msra.mxu0 0.0
      %1647 = vmatprep.subr.mxu0 0.0
      %1648 = vmatpush1.msra.mxu0 0.0
      %1649 = vmatprep.subr.mxu0 0.0
      %1650 = vmatpush1.msra.mxu0 0.0
      %1651 = vmatprep.subr.mxu0 0.0
      %1652 = vmatpush1.msra.mxu0 0.0
      %1653 = vmatprep.subr.mxu0 0.0
      %1654 = vmatpush1.msra.mxu0 0.0
      %1655 = vmatprep.mubr.f32.mxu0 0.0
      %1656 = vmatmul.mubr.f32.gmra.mrb[0].mxu0 %v1589
      %v1657 = vpop.f32.mrb[0].mxu0
      %v1658 = vadd.f32 1e-05, %v1657
      %v1659 = vpop.f32.mrb[0].mxu0
      %v1660 = vadd.f32 1e-05, %v1659
      %1661 = vdwg.mxu0
      %1662 = vmatprep.subr.mxu0 %v975
      %1663 = vmatpush1.msra.mxu0 %v974
      %1664 = vmatprep.subr.mxu0 %v983
      %1665 = vmatpush1.msra.mxu0 %v982
      %1666 = vmatprep.subr.mxu0 %v991
      %1667 = vmatpush1.msra.mxu0 %v990
      %1668 = vmatprep.subr.mxu0 %v999
      %1669 = vmatpush1.msra.mxu0 %v998
      %1670 = vmatprep.subr.mxu0 0.0
      %1671 = vmatpush1.msra.mxu0 0.0
      %1672 = vmatprep.subr.mxu0 0.0
      %1673 = vmatpush1.msra.mxu0 0.0
      %1674 = vmatprep.subr.mxu0 0.0
      %1675 = vmatpush1.msra.mxu0 0.0
      %1676 = vmatprep.subr.mxu0 0.0
      %1677 = vmatpush1.msra.mxu0 0.0
      %1678 = vmatprep.subr.mxu0 0.0
      %1679 = vmatpush1.msra.mxu0 0.0
      %1680 = vmatprep.subr.mxu0 0.0
      %1681 = vmatpush1.msra.mxu0 0.0
      %1682 = vmatprep.subr.mxu0 0.0
      %1683 = vmatpush1.msra.mxu0 0.0
      %1684 = vmatprep.subr.mxu0 0.0
      %1685 = vmatpush1.msra.mxu0 0.0
      %1686 = vmatprep.subr.mxu0 0.0
      %1687 = vmatpush1.msra.mxu0 0.0
      %1688 = vmatprep.subr.mxu0 0.0
      %1689 = vmatpush1.msra.mxu0 0.0
      %1690 = vmatprep.subr.mxu0 0.0
      %1691 = vmatpush1.msra.mxu0 0.0
      %1692 = vmatprep.subr.mxu0 0.0
      %1693 = vmatpush1.msra.mxu0 0.0
      %1694 = vmatprep.subr.mxu0 0.0
      %1695 = vmatpush1.msra.mxu0 0.0
      %1696 = vmatprep.subr.mxu0 0.0
      %1697 = vmatpush1.msra.mxu0 0.0
      %1698 = vmatprep.subr.mxu0 0.0
      %1699 = vmatpush1.msra.mxu0 0.0
      %1700 = vmatprep.subr.mxu0 0.0
      %1701 = vmatpush1.msra.mxu0 0.0
      %1702 = vmatprep.subr.mxu0 0.0
      %1703 = vmatpush1.msra.mxu0 0.0
      %1704 = vmatprep.subr.mxu0 0.0
      %1705 = vmatpush1.msra.mxu0 0.0
      %1706 = vmatprep.subr.mxu0 0.0
      %1707 = vmatpush1.msra.mxu0 0.0
      %1708 = vmatprep.subr.mxu0 0.0
      %1709 = vmatpush1.msra.mxu0 0.0
      %1710 = vmatprep.subr.mxu0 0.0
      %1711 = vmatpush1.msra.mxu0 0.0
      %1712 = vmatprep.subr.mxu0 0.0
      %1713 = vmatpush1.msra.mxu0 0.0
      %1714 = vmatprep.subr.mxu0 0.0
      %1715 = vmatpush1.msra.mxu0 0.0
      %1716 = vmatprep.subr.mxu0 0.0
      %1717 = vmatpush1.msra.mxu0 0.0
      %1718 = vmatprep.subr.mxu0 0.0
      %1719 = vmatpush1.msra.mxu0 0.0
      %1720 = vmatprep.subr.mxu0 0.0
      %1721 = vmatpush1.msra.mxu0 0.0
      %1722 = vmatprep.subr.mxu0 0.0
      %1723 = vmatpush1.msra.mxu0 0.0
      %1724 = vmatprep.subr.mxu0 0.0
      %1725 = vmatpush1.msra.mxu0 0.0
      %1726 = vmatprep.mubr.f32.mxu0 0.0
      %1727 = vmatmul.mubr.f32.gmra.mrb[0].mxu0 %v1589
      %v1728 = vpop.f32.mrb[0].mxu0
      %v1729 = vadd.f32 1e-05, %v1728
      %v1730 = vpop.f32.mrb[0].mxu0
      %v1731 = vadd.f32 1e-05, %v1730
      %1732 = vdwg.mxu0
      %1733 = vmatprep.subr.mxu0 %v977
      %1734 = vmatpush1.msra.mxu0 %v976
      %1735 = vmatprep.subr.mxu0 %v985
      %1736 = vmatpush1.msra.mxu0 %v984
      %1737 = vmatprep.subr.mxu0 %v993
      %1738 = vmatpush1.msra.mxu0 %v992
      %1739 = vmatprep.subr.mxu0 %v1001
      %1740 = vmatpush1.msra.mxu0 %v1000
      %1741 = vmatprep.subr.mxu0 0.0
      %1742 = vmatpush1.msra.mxu0 0.0
      %1743 = vmatprep.subr.mxu0 0.0
      %1744 = vmatpush1.msra.mxu0 0.0
      %1745 = vmatprep.subr.mxu0 0.0
      %1746 = vmatpush1.msra.mxu0 0.0
      %1747 = vmatprep.subr.mxu0 0.0
      %1748 = vmatpush1.msra.mxu0 0.0
      %1749 = vmatprep.subr.mxu0 0.0
      %1750 = vmatpush1.msra.mxu0 0.0
      %1751 = vmatprep.subr.mxu0 0.0
      %1752 = vmatpush1.msra.mxu0 0.0
      %1753 = vmatprep.subr.mxu0 0.0
      %1754 = vmatpush1.msra.mxu0 0.0
      %1755 = vmatprep.subr.mxu0 0.0
      %1756 = vmatpush1.msra.mxu0 0.0
      %1757 = vmatprep.subr.mxu0 0.0
      %1758 = vmatpush1.msra.mxu0 0.0
      %1759 = vmatprep.subr.mxu0 0.0
      %1760 = vmatpush1.msra.mxu0 0.0
      %1761 = vmatprep.subr.mxu0 0.0
      %1762 = vmatpush1.msra.mxu0 0.0
      %1763 = vmatprep.subr.mxu0 0.0
      %1764 = vmatpush1.msra.mxu0 0.0
      %1765 = vmatprep.subr.mxu0 0.0
      %1766 = vmatpush1.msra.mxu0 0.0
      %1767 = vmatprep.subr.mxu0 0.0
      %1768 = vmatpush1.msra.mxu0 0.0
      %1769 = vmatprep.subr.mxu0 0.0
      %1770 = vmatpush1.msra.mxu0 0.0
      %1771 = vmatprep.subr.mxu0 0.0
      %1772 = vmatpush1.msra.mxu0 0.0
      %1773 = vmatprep.subr.mxu0 0.0
      %1774 = vmatpush1.msra.mxu0 0.0
      %1775 = vmatprep.subr.mxu0 0.0
      %1776 = vmatpush1.msra.mxu0 0.0
      %1777 = vmatprep.subr.mxu0 0.0
      %1778 = vmatpush1.msra.mxu0 0.0
      %1779 = vmatprep.subr.mxu0 0.0
      %1780 = vmatpush1.msra.mxu0 0.0
      %1781 = vmatprep.subr.mxu0 0.0
      %1782 = vmatpush1.msra.mxu0 0.0
      %1783 = vmatprep.subr.mxu0 0.0
      %1784 = vmatpush1.msra.mxu0 0.0
      %1785 = vmatprep.subr.mxu0 0.0
      %1786 = vmatpush1.msra.mxu0 0.0
      %1787 = vmatprep.subr.mxu0 0.0
      %1788 = vmatpush1.msra.mxu0 0.0
      %1789 = vmatprep.subr.mxu0 0.0
      %1790 = vmatpush1.msra.mxu0 0.0
      %1791 = vmatprep.subr.mxu0 0.0
      %1792 = vmatpush1.msra.mxu0 0.0
      %1793 = vmatprep.subr.mxu0 0.0
      %1794 = vmatpush1.msra.mxu0 0.0
      %1795 = vmatprep.subr.mxu0 0.0
      %1796 = vmatpush1.msra.mxu0 0.0
      %1797 = vmatprep.mubr.f32.mxu0 0.0
      %1798 = vmatmul.mubr.f32.gmra.mrb[0].mxu0 %v1589
      %v1799 = vpop.f32.mrb[0].mxu0
      %v1800 = vadd.f32 1e-05, %v1799
      %v1801 = vpop.f32.mrb[0].mxu0
      %v1802 = vadd.f32 1e-05, %v1801
      %1803 = vdwg.mxu0
      %1804 = vmatprep.subr.mxu0 %v979
      %1805 = vmatpush1.msra.mxu0 %v978
      %1806 = vmatprep.subr.mxu0 %v987
      %1807 = vmatpush1.msra.mxu0 %v986
      %1808 = vmatprep.subr.mxu0 %v995
      %1809 = vmatpush1.msra.mxu0 %v994
      %1810 = vmatprep.subr.mxu0 %v1003
      %1811 = vmatpush1.msra.mxu0 %v1002
      %1812 = vmatprep.subr.mxu0 0.0
      %1813 = vmatpush1.msra.mxu0 0.0
      %1814 = vmatprep.subr.mxu0 0.0
      %1815 = vmatpush1.msra.mxu0 0.0
      %1816 = vmatprep.subr.mxu0 0.0
      %1817 = vmatpush1.msra.mxu0 0.0
      %1818 = vmatprep.subr.mxu0 0.0
      %1819 = vmatpush1.msra.mxu0 0.0
      %1820 = vmatprep.subr.mxu0 0.0
      %1821 = vmatpush1.msra.mxu0 0.0
      %1822 = vmatprep.subr.mxu0 0.0
      %1823 = vmatpush1.msra.mxu0 0.0
      %1824 = vmatprep.subr.mxu0 0.0
      %1825 = vmatpush1.msra.mxu0 0.0
      %1826 = vmatprep.subr.mxu0 0.0
      %1827 = vmatpush1.msra.mxu0 0.0
      %1828 = vmatprep.subr.mxu0 0.0
      %1829 = vmatpush1.msra.mxu0 0.0
      %1830 = vmatprep.subr.mxu0 0.0
      %1831 = vmatpush1.msra.mxu0 0.0
      %1832 = vmatprep.subr.mxu0 0.0
      %1833 = vmatpush1.msra.mxu0 0.0
      %1834 = vmatprep.subr.mxu0 0.0
      %1835 = vmatpush1.msra.mxu0 0.0
      %1836 = vmatprep.subr.mxu0 0.0
      %1837 = vmatpush1.msra.mxu0 0.0
      %1838 = vmatprep.subr.mxu0 0.0
      %1839 = vmatpush1.msra.mxu0 0.0
      %1840 = vmatprep.subr.mxu0 0.0
      %1841 = vmatpush1.msra.mxu0 0.0
      %1842 = vmatprep.subr.mxu0 0.0
      %1843 = vmatpush1.msra.mxu0 0.0
      %1844 = vmatprep.subr.mxu0 0.0
      %1845 = vmatpush1.msra.mxu0 0.0
      %1846 = vmatprep.subr.mxu0 0.0
      %1847 = vmatpush1.msra.mxu0 0.0
      %1848 = vmatprep.subr.mxu0 0.0
      %1849 = vmatpush1.msra.mxu0 0.0
      %1850 = vmatprep.subr.mxu0 0.0
      %1851 = vmatpush1.msra.mxu0 0.0
      %1852 = vmatprep.subr.mxu0 0.0
      %1853 = vmatpush1.msra.mxu0 0.0
      %1854 = vmatprep.subr.mxu0 0.0
      %1855 = vmatpush1.msra.mxu0 0.0
      %1856 = vmatprep.subr.mxu0 0.0
      %1857 = vmatpush1.msra.mxu0 0.0
      %1858 = vmatprep.subr.mxu0 0.0
      %1859 = vmatpush1.msra.mxu0 0.0
      %1860 = vmatprep.subr.mxu0 0.0
      %1861 = vmatpush1.msra.mxu0 0.0
      %1862 = vmatprep.subr.mxu0 0.0
      %1863 = vmatpush1.msra.mxu0 0.0
      %1864 = vmatprep.subr.mxu0 0.0
      %1865 = vmatpush1.msra.mxu0 0.0
      %1866 = vmatprep.subr.mxu0 0.0
      %1867 = vmatpush1.msra.mxu0 0.0
      %1868 = vmatprep.mubr.f32.mxu0 0.0
      %1869 = vmatmul.mubr.f32.gmra.mrb[0].mxu0 %v1589
      %v1870 = vpop.f32.mrb[0].mxu0
      %v1871 = vadd.f32 1e-05, %v1870
      %v1872 = vpop.f32.mrb[0].mxu0
      %v1873 = vadd.f32 1e-05, %v1872
      %1874 = vdwg.mxu0
      %v1875 = vrsqrt.pop %v1658
      %v1876 = vrsqrt.pop %v1660
      %v1877 = vrsqrt.pop %v1729
      %v1878 = vrsqrt.pop %v1731
      %v1879 = vrsqrt.pop %v1800
      %v1880 = vrsqrt.pop %v1802
      %v1881 = vrsqrt.pop %v1871
      %v1882 = vrsqrt.pop %v1873
      %v1883 = vmul.f32 %v1292, %v1875
      %v1884 = vmul.f32 %v1293, %v1876
      %v1885 = vmul.f32 %v1294, %v1877
      %v1886 = vmul.f32 %v1295, %v1878
      %v1887 = vmul.f32 %v1296, %v1879
      %v1888 = vmul.f32 %v1297, %v1880
      %v1889 = vmul.f32 %v1298, %v1881
      %v1890 = vmul.f32 %v1299, %v1882
      %v1891 = vld [vmem:[%s4] sm:$0xff]
      %v1893 = vlaneseq
      %v1894 = vshrl.u32 %v1893, 7
      %v1895 = vsub.s32 0, %v1894
      %v1896 = vrot.slane %v1891, %v1895
      %v1897 = vlaneseq
      %v1898 = vshrl.u32 %v1897, 7
      %v1899 = vsub.s32 1, %v1898
      %v1900 = vrot.slane %v1891, %v1899
      %v1901 = vlaneseq
      %v1902 = vshrl.u32 %v1901, 7
      %v1903 = vsub.s32 2, %v1902
      %v1904 = vrot.slane %v1891, %v1903
      %v1905 = vlaneseq
      %v1906 = vshrl.u32 %v1905, 7
      %v1907 = vsub.s32 3, %v1906
      %v1908 = vrot.slane %v1891, %v1907
      %v1909 = vlaneseq
      %v1910 = vshrl.u32 %v1909, 7
      %v1911 = vsub.s32 4, %v1910
      %v1912 = vrot.slane %v1891, %v1911
      %v1913 = vlaneseq
      %v1914 = vshrl.u32 %v1913, 7
      %v1915 = vsub.s32 5, %v1914
      %v1916 = vrot.slane %v1891, %v1915
      %v1917 = vlaneseq
      %v1918 = vshrl.u32 %v1917, 7
      %v1919 = vsub.s32 6, %v1918
      %v1920 = vrot.slane %v1891, %v1919
      %v1921 = vlaneseq
      %v1922 = vshrl.u32 %v1921, 7
      %v1923 = vsub.s32 7, %v1922
      %v1924 = vrot.slane %v1891, %v1923
      %v1933 = vmul.f32 %v1883, %v1896
      %v1934 = vmul.f32 %v1884, %v1900
      %v1935 = vmul.f32 %v1885, %v1904
      %v1936 = vmul.f32 %v1886, %v1908
      %v1937 = vmul.f32 %v1887, %v1912
      %v1938 = vmul.f32 %v1888, %v1916
      %v1939 = vmul.f32 %v1889, %v1920
      %v1940 = vmul.f32 %v1890, %v1924
      %v1941 = vld [vmem:[%s5] sm:$0xff]
      %v1943 = vlaneseq
      %v1944 = vshrl.u32 %v1943, 7
      %v1945 = vsub.s32 0, %v1944
      %v1946 = vrot.slane %v1941, %v1945
      %v1947 = vlaneseq
      %v1948 = vshrl.u32 %v1947, 7
      %v1949 = vsub.s32 1, %v1948
      %v1950 = vrot.slane %v1941, %v1949
      %v1951 = vlaneseq
      %v1952 = vshrl.u32 %v1951, 7
      %v1953 = vsub.s32 2, %v1952
      %v1954 = vrot.slane %v1941, %v1953
      %v1955 = vlaneseq
      %v1956 = vshrl.u32 %v1955, 7
      %v1957 = vsub.s32 3, %v1956
      %v1958 = vrot.slane %v1941, %v1957
      %v1959 = vlaneseq
      %v1960 = vshrl.u32 %v1959, 7
      %v1961 = vsub.s32 4, %v1960
      %v1962 = vrot.slane %v1941, %v1961
      %v1963 = vlaneseq
      %v1964 = vshrl.u32 %v1963, 7
      %v1965 = vsub.s32 5, %v1964
      %v1966 = vrot.slane %v1941, %v1965
      %v1967 = vlaneseq
      %v1968 = vshrl.u32 %v1967, 7
      %v1969 = vsub.s32 6, %v1968
      %v1970 = vrot.slane %v1941, %v1969
      %v1971 = vlaneseq
      %v1972 = vshrl.u32 %v1971, 7
      %v1973 = vsub.s32 7, %v1972
      %v1974 = vrot.slane %v1941, %v1973
      %v1983 = vadd.f32 %v1933, %v1946
      %v1984 = vadd.f32 %v1934, %v1950
      %v1985 = vadd.f32 %v1935, %v1954
      %v1986 = vadd.f32 %v1936, %v1958
      %v1987 = vadd.f32 %v1937, %v1962
      %v1988 = vadd.f32 %v1938, %v1966
      %v1989 = vadd.f32 %v1939, %v1970
      %v1990 = vadd.f32 %v1940, %v1974
      %v1991 = vxor.u32 %v1983, 2147483648
      %v1992 = vxor.u32 %v1984, 2147483648
      %v1993 = vxor.u32 %v1985, 2147483648
      %v1994 = vxor.u32 %v1986, 2147483648
      %v1995 = vxor.u32 %v1987, 2147483648
      %v1996 = vxor.u32 %v1988, 2147483648
      %v1997 = vxor.u32 %v1989, 2147483648
      %v1998 = vxor.u32 %v1990, 2147483648
      %v1999 = vmul.f32 %v1991, 1.442695
      %v2000 = vpow.pop %v1999
      %v2001 = vmul.f32 %v1992, 1.442695
      %v2002 = vpow.pop %v2001
      %v2003 = vmul.f32 %v1993, 1.442695
      %v2004 = vpow.pop %v2003
      %v2005 = vmul.f32 %v1994, 1.442695
      %v2006 = vpow.pop %v2005
      %v2007 = vmul.f32 %v1995, 1.442695
      %v2008 = vpow.pop %v2007
      %v2009 = vmul.f32 %v1996, 1.442695
      %v2010 = vpow.pop %v2009
      %v2011 = vmul.f32 %v1997, 1.442695
      %v2012 = vpow.pop %v2011
      %v2013 = vmul.f32 %v1998, 1.442695
      %v2014 = vpow.pop %v2013
      %v2015 = vadd.f32 %v2000, 1.0
      %v2016 = vadd.f32 %v2002, 1.0
      %v2017 = vadd.f32 %v2004, 1.0
      %v2018 = vadd.f32 %v2006, 1.0
      %v2019 = vadd.f32 %v2008, 1.0
      %v2020 = vadd.f32 %v2010, 1.0
      %v2021 = vadd.f32 %v2012, 1.0
      %v2022 = vadd.f32 %v2014, 1.0
      %v2023 = vrcp.pop %v2015
      %v2024 = vmul.f32 1.0, %v2023
      %v2025 = vrcp.pop %v2016
      %v2026 = vmul.f32 1.0, %v2025
      %v2027 = vrcp.pop %v2017
      %v2028 = vmul.f32 1.0, %v2027
      %v2029 = vrcp.pop %v2018
      %v2030 = vmul.f32 1.0, %v2029
      %v2031 = vrcp.pop %v2019
      %v2032 = vmul.f32 1.0, %v2031
      %v2033 = vrcp.pop %v2020
      %v2034 = vmul.f32 1.0, %v2033
      %v2035 = vrcp.pop %v2021
      %v2036 = vmul.f32 1.0, %v2035
      %v2037 = vrcp.pop %v2022
      %v2038 = vmul.f32 1.0, %v2037
      %v2039 = vmul.f32 %v1983, %v2024
      %v2040 = vmul.f32 %v1984, %v2026
      %v2041 = vmul.f32 %v1985, %v2028
      %v2042 = vmul.f32 %v1986, %v2030
      %v2043 = vmul.f32 %v1987, %v2032
      %v2044 = vmul.f32 %v1988, %v2034
      %v2045 = vmul.f32 %v1989, %v2036
      %v2046 = vmul.f32 %v1990, %v2038
      %v2055 = vcombine.low %v2039, %v2040
      %v2056 = vcombine.low %v2041, %v2042
      %v2057 = vcombine.low %v2043, %v2044
      %v2058 = vcombine.low %v2045, %v2046
      %2063 = vst [vmem:[%s248] sm:$0xff] %v2055
      %2064 = vst [vmem:[%s248 + $0x8] sm:$0xff] %v2056
      %2065 = vst [vmem:[%s248 + $0x10] sm:$0xff] %v2057
      %2066 = vst [vmem:[%s248 + $0x18] sm:$0xff] %v2058
      %p2067 = scmp.lt.s32.totalorder %s17, 1
      %s2068 = scalar_select %p2067, %s17, 1
      %s2069 = smul.addr %s2068, 8
      %s2070 = smul.addr %s2069, 4
      %s2071 = scalar_lea.vmem %s6, %s2070
      // Predicated region
      $region45: #{dilation_convolution_1d_unit.1} parent=43 // pred_check
        %p2072 = pneg %p166
      $region46: #{dilation_convolution_1d_unit.1} parent=43 // pred_check_branch
        %2074 = sbr.rel (%p2072) target = $region48
      $region47: #{dilation_convolution_1d_unit.1} parent=43 // pred_region
        _
      $region48: #{dilation_convolution_1d_unit.1} parent=43 // pred_fallthru
        _
    $region44: #{dilation_convolution_1d_unit.1} parent=5 // pred_fallthru
      _
    %p2075 = scmp.le.s32.totalorder 2, %s12
    // Predicated region
    $region49: #{dilation_convolution_1d_unit.1} parent=5 // pred_check
      %p2076 = pneg %p2075
    $region50: #{dilation_convolution_1d_unit.1} parent=5 // pred_check_branch
      %2078 = sbr.rel (%p2076) target = $region52
    $region51: #{dilation_convolution_1d_unit.1} parent=5 // pred_region
      %s2079 = ssub.s32 %s12, 2
      // Predicated region
      $region53: #{dilation_convolution_1d_unit.1} parent=51 // pred_check
        %p2080 = pneg %p172
      $region54: #{dilation_convolution_1d_unit.1} parent=51 // pred_check_branch
        %2082 = sbr.rel (%p2080) target = $region56
      $region55: #{dilation_convolution_1d_unit.1} parent=51 // pred_region
        %p2083 = scmp.lt.s32.totalorder %s18, 1
        %s2084 = scalar_select %p2083, %s18, 1
        %s2085 = smul.addr %s2084, 8
        %s2086 = smul.addr %s2085, 4
        %s2087 = scalar_lea.vmem %s6, %s2086
      $region56: #{dilation_convolution_1d_unit.1} parent=51 // pred_fallthru
        _
    $region52: #{dilation_convolution_1d_unit.1} parent=5 // pred_fallthru
      _
  $region6: #{dilation_convolution_1d_unit.1} parent=0 // loop_footer
    %s16 = sadd.s32 1, %s12
  $region7: #{dilation_convolution_1d_unit.1} parent=0 // loop_footer_branch
    %11 = sbr.rel target = $region3
  $region8: #{dilation_convolution_1d_unit.1} parent=0 // loop_exit
    _

</llo_original>
